<compile_context>
chip_gen: v5e
topology: v5e:2x2
jax: 0.10.0
libtpu: 0.0.40
codegen_flags: <defaults>
</compile_context>

<pallas_src>
from functools import partial

import numpy as np

import jax
import jax.numpy as jnp
from jax.experimental import pallas as pl
from jax.experimental.pallas import tpu as pltpu


def _pass1_step_bytes(R, Wp, Ci, Co, csz):
    """Rough per-grid-step VMEM footprint of pass 1 (blocks double-buffered)."""
    x_blk = R * 2 * Wp * 2 * Ci * csz
    y_blk = R * Wp * Co * csz
    io = 2 * (x_blk + y_blk + 2 * Wp * Ci * csz + 9 * Ci * Co * csz + 2 * Co * 4)
    tmp = (R * Wp * 9 * Ci * csz          # im2col LHS
           + R * Wp * Co * 4              # f32 matmul accumulator
           + 5 * (R + 2) * Wp * Ci * csz  # pooled + halo-extended + shifted copies
           + R * Wp * 2 * Ci * csz)       # row-pooled intermediate
    return io + tmp


def _pick_row_tile(Hp, Wp, Ci, Co, csz, budget=18 << 20, max_rows=64):
    """Largest divisor of Hp (<= max_rows) whose pass-1 working set fits budget."""
    best = 1
    for r in range(1, min(Hp, max_rows) + 1):
        if Hp % r == 0 and _pass1_step_bytes(r, Wp, Ci, Co, csz) <= budget:
            best = r
    return best


def _pool_conv_kernel(x_ref, halo_ref, w_ref, y_ref, stats_ref):
    """MaxPool2d(2) + 3x3 conv (pad=1, no bias) + per-step BN partial stats.

    x_ref    : (1, R, 2, Wp, 2*Ci)  pooled-row tile of the input; dim 2 = pooling
               row parity, lane halves [0:Ci]/[Ci:2Ci] = pooling column parity.
    halo_ref : (1, 1, 2, Wp, Ci)    pooled rows above/below this tile (zeros at the
               image border) -> conv row shifts stay on the outer axis.
    w_ref    : (9*Ci, Co)           conv taps, row index = (kh*3 + kw)*Ci + ci.
    y_ref    : (1, R, Wp, Co)       conv output tile (compute dtype).
    stats_ref: (1, 1, 2, Co)        per-step [sum, sum-of-squares] over (R, Wp).
    """
    R = x_ref.shape[1]
    Wp = x_ref.shape[3]
    Ci = x_ref.shape[4] // 2
    Co = y_ref.shape[-1]

    # ---- MaxPool2d(2): row-parity max (outer axis), then column-parity max
    # (lane halves).  Stays in compute dtype (exact for max).
    xr = x_ref[0]                                              # (R, 2, Wp, 2*Ci)
    rows = jnp.maximum(xr[:, 0], xr[:, 1])                     # (R, Wp, 2*Ci)
    pooled = jnp.maximum(rows[..., :Ci], rows[..., Ci:])       # (R, Wp, Ci)

    # ---- pooled rows r-1 .. r+R: halo rows concatenated on the OUTER axis (free).
    hal = halo_ref[0, 0]                                       # (2, Wp, Ci)
    p = jnp.concatenate([hal[0:1], pooled, hal[1:2]], axis=0)  # (R+2, Wp, Ci)

    # ---- column +-1 shifts with zero edge fill: value-level sublane shift, no
    # padded scratch round-trip and no unaligned scratch loads.
    zcol = jnp.zeros((R + 2, 1, Ci), p.dtype)
    left = jnp.concatenate([zcol, p[:, :Wp - 1, :]], axis=1)   # p[.., w-1, :]
    right = jnp.concatenate([p[:, 1:, :], zcol], axis=1)       # p[.., w+1, :]

    # ---- im2col: ONE MXU matmul, M = R*Wp, K = 9*Ci (all taps folded), N = Co.
    shifted = (left, p, right)                                 # indexed by kw
    slabs = [shifted[kw][kh:kh + R] for kh in range(3) for kw in range(3)]
    lhs = jnp.concatenate(slabs, axis=-1).reshape(R * Wp, 9 * Ci)
    acc = jnp.dot(lhs, w_ref[...], preferred_element_type=jnp.float32)

    y_ref[0] = acc.reshape(R, Wp, Co).astype(y_ref.dtype)

    # ---- BN partial statistics (f32, from the un-rounded accumulator).
    s1 = jnp.sum(acc, axis=0, keepdims=True)                   # (1, Co)
    s2 = jnp.sum(acc * acc, axis=0, keepdims=True)             # (1, Co)
    stats_ref[0, 0] = jnp.concatenate([s1, s2], axis=0)        # (2, Co)


def _bn_silu_kernel(y_ref, scale_ref, shift_ref, o_ref):
    # y_ref/o_ref: (1, R, Wp, Co); scale/shift: (1, Co) f32 (broadcast on lanes).
    z = y_ref[...].astype(jnp.float32) * scale_ref[...] + shift_ref[...]
    o_ref[...] = (z * jax.nn.sigmoid(z)).astype(o_ref.dtype)   # SiLU


@partial(jax.jit, static_argnames=("compute_dtype", "row_tile"))
def down_forward(x_nchw, conv_w, bn_gamma, bn_beta, *,
                 compute_dtype=jnp.bfloat16, row_tile=None):
    """x: (N, Cin, H, W) f32, conv_w: (Cout, Cin, 3, 3) -> (N, Cout, H//2, W//2) f32."""
    N, Cin, H, W = x_nchw.shape
    Cout = conv_w.shape[0]
    Hp, Wp = H // 2, W // 2
    eps = 1e-5
    csz = jnp.dtype(compute_dtype).itemsize

    R = row_tile if row_tile is not None else _pick_row_tile(Hp, Wp, Cin, Cout, csz)
    assert Hp % R == 0, (Hp, R)
    T = Hp // R

    # --- glue (fused by XLA): crop-to-even, NCHW->NHWC, cast; FREE parity reshape.
    x = jnp.transpose(x_nchw[:, :, :2 * Hp, :2 * Wp], (0, 2, 3, 1)).astype(compute_dtype)
    x5 = x.reshape(N, Hp, 2, Wp, 2 * Cin)        # (n, hp, row-parity, wp, parity*Cin+c)

    # --- pooled halo rows at tile boundaries (tiny: 2 pooled rows per tile).
    if T > 1:
        b = np.arange(1, T) * R                                  # boundary pooled rows

        def pool_rows(pr):
            m = jnp.maximum(x[:, 2 * pr], x[:, 2 * pr + 1])      # (N, T-1, W, Cin)
            m = m.reshape(N, T - 1, Wp, 2, Cin)
            return jnp.maximum(m[:, :, :, 0], m[:, :, :, 1])     # (N, T-1, Wp, Cin)

        zero = jnp.zeros((N, 1, Wp, Cin), compute_dtype)
        top = jnp.concatenate([zero, pool_rows(b - 1)], axis=1)  # row above each tile
        bot = jnp.concatenate([pool_rows(b), zero], axis=1)      # row below each tile
        halo = jnp.stack([top, bot], axis=2)                     # (N, T, 2, Wp, Cin)
    else:
        halo = jnp.zeros((N, 1, 2, Wp, Cin), compute_dtype)

    # --- conv weights (Cout, Cin, 3, 3) -> (9*Cin, Cout), row = (kh*3+kw)*Cin + ci.
    w = jnp.transpose(conv_w, (2, 3, 1, 0)).reshape(9 * Cin, Cout).astype(compute_dtype)

    step_bytes = _pass1_step_bytes(R, Wp, Cin, Cout, csz)
    vmem1 = int(min(56 << 20, max(32 << 20, 2 * step_bytes)))

    # --- pass 1: pool + conv + per-step BN partial stats (pipelined over (N, T)).
    conv_out, stats = pl.pallas_call(
        _pool_conv_kernel,
        out_shape=(jax.ShapeDtypeStruct((N, Hp, Wp, Cout), compute_dtype),
                   jax.ShapeDtypeStruct((N, T, 2, Cout), jnp.float32)),
        grid=(N, T),
        in_specs=[
            pl.BlockSpec((1, R, 2, Wp, 2 * Cin), lambda n, t: (n, t, 0, 0, 0)),
            pl.BlockSpec((1, 1, 2, Wp, Cin), lambda n, t: (n, t, 0, 0, 0)),
            pl.BlockSpec((9 * Cin, Cout), lambda n, t: (0, 0)),   # weights resident
        ],
        out_specs=(
            pl.BlockSpec((1, R, Wp, Cout), lambda n, t: (n, t, 0, 0)),
            pl.BlockSpec((1, 1, 2, Cout), lambda n, t: (n, t, 0, 0)),
        ),
        compiler_params=pltpu.CompilerParams(
            dimension_semantics=("parallel", "parallel"),  # v7x: TCs split N*T steps
            vmem_limit_bytes=vmem1,
        ),
    )(x5, halo, w)

    # --- BN statistics finalize (Cout-sized math; train-mode biased variance).
    # TODO(synk): E[x^2]-E[x]^2 in f32 can lose accuracy when |mean| >> std.
    tot = jnp.sum(stats, axis=(0, 1))                            # (2, Cout)
    cnt = jnp.float32(N * Hp * Wp)
    mean = tot[0] / cnt
    var = jnp.maximum(tot[1] / cnt - mean * mean, 0.0)
    inv_std = jax.lax.rsqrt(var + eps)
    gamma = bn_gamma.astype(jnp.float32)
    beta = bn_beta.astype(jnp.float32)
    scale = (gamma * inv_std).reshape(1, Cout)
    shift = (beta - mean * gamma * inv_std).reshape(1, Cout)

    # --- pass 2: BN + SiLU elementwise, written in place over the conv intermediate.
    y_blk = R * Wp * Cout * csz
    vmem2 = int(min(56 << 20, max(16 << 20, 8 * y_blk)))
    y = pl.pallas_call(
        _bn_silu_kernel,
        out_shape=jax.ShapeDtypeStruct((N, Hp, Wp, Cout), compute_dtype),
        grid=(N, T),
        in_specs=[
            pl.BlockSpec((1, R, Wp, Cout), lambda n, t: (n, t, 0, 0)),
            pl.BlockSpec((1, Cout), lambda n, t: (0, 0)),
            pl.BlockSpec((1, Cout), lambda n, t: (0, 0)),
        ],
        out_specs=pl.BlockSpec((1, R, Wp, Cout), lambda n, t: (n, t, 0, 0)),
        input_output_aliases={0: 0},
        compiler_params=pltpu.CompilerParams(
            dimension_semantics=("parallel", "parallel"),
            vmem_limit_bytes=vmem2,
        ),
    )(conv_out, scale, shift)

    # --- NHWC -> NCHW (channels were never padded, so no crop needed).
    return jnp.transpose(y, (0, 3, 1, 2)).astype(jnp.float32)


def down_reference(x, conv_w, bn_gamma, bn_beta, eps=1e-5):
    """Pure-JAX f32 reference matching the PyTorch forward (train-mode BN)."""
    xp = jax.lax.reduce_window(x, -jnp.inf, jax.lax.max,
                               (1, 1, 2, 2), (1, 1, 2, 2), "VALID")
    y = jax.lax.conv_general_dilated(
        xp, conv_w, window_strides=(1, 1), padding=((1, 1), (1, 1)),
        dimension_numbers=("NCHW", "OIHW", "NCHW"))
    mean = y.mean(axis=(0, 2, 3), keepdims=True)
    var = y.var(axis=(0, 2, 3), keepdims=True)      # biased, like PyTorch BN forward
    yn = (y - mean) / jnp.sqrt(var + eps)
    yn = yn * bn_gamma.reshape(1, -1, 1, 1) + bn_beta.reshape(1, -1, 1, 1)
    return yn * jax.nn.sigmoid(yn)


if __name__ == "__main__":
    key = jax.random.PRNGKey(0)
    k_x, k_w, k_g, k_b = jax.random.split(key, 4)

    N, C_in, H, W = 2, 4, 16, 16
    C_out = 8

    x = jax.random.normal(k_x, (N, C_in, H, W), dtype=jnp.float32)
    conv_w = 0.1 * jax.random.normal(k_w, (C_out, C_in, 3, 3), dtype=jnp.float32)
    bn_gamma = 1.0 + 0.1 * jax.random.normal(k_g, (C_out,), dtype=jnp.float32)
    bn_beta = 0.1 * jax.random.normal(k_b, (C_out,), dtype=jnp.float32)

    ref = down_reference(x, conv_w, bn_gamma, bn_beta)

    # Exactness check: f32 compute path matches the PyTorch-equivalent reference.
    out_f32 = jax.block_until_ready(
        down_forward(x, conv_w, bn_gamma, bn_beta, compute_dtype=jnp.float32))
    assert out_f32.shape == (N, C_out, H // 2, W // 2), out_f32.shape
    assert jnp.allclose(out_f32, ref, atol=1e-4, rtol=1e-4), (
        float(jnp.max(jnp.abs(out_f32 - ref))))

    # Same, but forcing multiple row tiles (T=2) to exercise the halo path.
    out_tiled = jax.block_until_ready(
        down_forward(x, conv_w, bn_gamma, bn_beta,
                     compute_dtype=jnp.float32, row_tile=4))
    assert jnp.allclose(out_tiled, ref, atol=1e-4, rtol=1e-4), (
        float(jnp.max(jnp.abs(out_tiled - ref))))

    # Default fast path: bf16 activations/weights/intermediates, f32 accumulation/BN.
    out_bf16 = jax.block_until_ready(down_forward(x, conv_w, bn_gamma, bn_beta))
    assert out_bf16.shape == (N, C_out, H // 2, W // 2), out_bf16.shape
    assert jnp.allclose(out_bf16, ref, atol=3e-2, rtol=3e-2), (
        float(jnp.max(jnp.abs(out_bf16 - ref))))

    print("KERNEL_OK")
</pallas_src>

<mosaic_0001>
module attributes {stable_mosaic.version = 11 : i64} {
  func.func @_pool_conv_kernel(%arg0: i32, %arg1: i32, %arg2: memref<1x8x2x8x8xf32, #tpu.memory_space<vmem>>, %arg3: memref<1x1x2x8x4xf32, #tpu.memory_space<vmem>>, %arg4: memref<36x8xf32, #tpu.memory_space<vmem>>, %arg5: memref<1x8x8x8xf32, #tpu.memory_space<vmem>>, %arg6: memref<1x1x2x8xf32, #tpu.memory_space<vmem>>) attributes {dimension_semantics = [#tpu.dimension_semantics<parallel>, #tpu.dimension_semantics<parallel>], iteration_bounds = array<i64: 2, 1>, scalar_prefetch = 0 : i64, scratch_operands = 0 : i64, tpu.core_type = #tpu.core_type<tc>, window_params = [{transform_indices = @transform_0, window_bounds = array<i64: 1, 8, 2, 8, 8>}, {transform_indices = @transform_1, window_bounds = array<i64: 1, 1, 2, 8, 4>}, {pipeline_mode = #tpu.pipeline_mode<synchronous>, transform_indices = @transform_2, window_bounds = array<i64: 36, 8>}, {transform_indices = @transform_3, window_bounds = array<i64: 1, 8, 8, 8>}, {transform_indices = @transform_4, window_bounds = array<i64: 1, 1, 2, 8>}]} {
    %c0 = arith.constant 0 : index
    %c0_0 = arith.constant 0 : index
    %c0_1 = arith.constant 0 : index
    %c0_2 = arith.constant 0 : index
    %c0_3 = arith.constant 0 : index
    %0 = vector.load %arg2[%c0, %c0_0, %c0_1, %c0_2, %c0_3] : memref<1x8x2x8x8xf32, #tpu.memory_space<vmem>>, vector<1x8x2x8x8xf32>
    %1 = vector.shape_cast %0 : vector<1x8x2x8x8xf32> to vector<8x2x8x8xf32>
    %2 = vector.extract_strided_slice %1 {offsets = [0, 0, 0, 0], sizes = [8, 1, 8, 8], strides = [1, 1, 1, 1]} : vector<8x2x8x8xf32> to vector<8x1x8x8xf32>
    %3 = vector.shape_cast %2 : vector<8x1x8x8xf32> to vector<8x8x8xf32>
    %4 = vector.extract_strided_slice %1 {offsets = [0, 1, 0, 0], sizes = [8, 1, 8, 8], strides = [1, 1, 1, 1]} : vector<8x2x8x8xf32> to vector<8x1x8x8xf32>
    %5 = vector.shape_cast %4 : vector<8x1x8x8xf32> to vector<8x8x8xf32>
    %6 = arith.maximumf %3, %5 : vector<8x8x8xf32>
    %7 = vector.extract_strided_slice %6 {offsets = [0, 0, 0], sizes = [8, 8, 4], strides = [1, 1, 1]} : vector<8x8x8xf32> to vector<8x8x4xf32>
    %8 = vector.extract_strided_slice %6 {offsets = [0, 0, 4], sizes = [8, 8, 4], strides = [1, 1, 1]} : vector<8x8x8xf32> to vector<8x8x4xf32>
    %9 = arith.maximumf %7, %8 : vector<8x8x4xf32>
    %c0_4 = arith.constant 0 : index
    %c0_5 = arith.constant 0 : index
    %c0_6 = arith.constant 0 : index
    %c0_7 = arith.constant 0 : index
    %c0_8 = arith.constant 0 : index
    %10 = vector.load %arg3[%c0_4, %c0_5, %c0_6, %c0_7, %c0_8] : memref<1x1x2x8x4xf32, #tpu.memory_space<vmem>>, vector<1x1x2x8x4xf32>
    %11 = vector.shape_cast %10 : vector<1x1x2x8x4xf32> to vector<2x8x4xf32>
    %12 = vector.extract_strided_slice %11 {offsets = [0, 0, 0], sizes = [1, 8, 4], strides = [1, 1, 1]} : vector<2x8x4xf32> to vector<1x8x4xf32>
    %13 = vector.extract_strided_slice %11 {offsets = [1, 0, 0], sizes = [1, 8, 4], strides = [1, 1, 1]} : vector<2x8x4xf32> to vector<1x8x4xf32>
    %14 = tpu.concatenate %12, %9, %13 in 0 : vector<1x8x4xf32>, vector<8x8x4xf32>, vector<1x8x4xf32> -> vector<10x8x4xf32>
    %cst = arith.constant 0.000000e+00 : f32
    %15 = vector.broadcast %cst : f32 to vector<10x1x4xf32>
    %16 = vector.extract_strided_slice %14 {offsets = [0, 0, 0], sizes = [10, 7, 4], strides = [1, 1, 1]} : vector<10x8x4xf32> to vector<10x7x4xf32>
    %17 = tpu.concatenate %15, %16 in 1 : vector<10x1x4xf32>, vector<10x7x4xf32> -> vector<10x8x4xf32>
    %18 = vector.extract_strided_slice %14 {offsets = [0, 1, 0], sizes = [10, 7, 4], strides = [1, 1, 1]} : vector<10x8x4xf32> to vector<10x7x4xf32>
    %19 = tpu.concatenate %18, %15 in 1 : vector<10x7x4xf32>, vector<10x1x4xf32> -> vector<10x8x4xf32>
    %20 = vector.extract_strided_slice %17 {offsets = [0, 0, 0], sizes = [8, 8, 4], strides = [1, 1, 1]} : vector<10x8x4xf32> to vector<8x8x4xf32>
    %21 = vector.extract_strided_slice %14 {offsets = [0, 0, 0], sizes = [8, 8, 4], strides = [1, 1, 1]} : vector<10x8x4xf32> to vector<8x8x4xf32>
    %22 = vector.extract_strided_slice %19 {offsets = [0, 0, 0], sizes = [8, 8, 4], strides = [1, 1, 1]} : vector<10x8x4xf32> to vector<8x8x4xf32>
    %23 = vector.extract_strided_slice %17 {offsets = [1, 0, 0], sizes = [8, 8, 4], strides = [1, 1, 1]} : vector<10x8x4xf32> to vector<8x8x4xf32>
    %24 = vector.extract_strided_slice %14 {offsets = [1, 0, 0], sizes = [8, 8, 4], strides = [1, 1, 1]} : vector<10x8x4xf32> to vector<8x8x4xf32>
    %25 = vector.extract_strided_slice %19 {offsets = [1, 0, 0], sizes = [8, 8, 4], strides = [1, 1, 1]} : vector<10x8x4xf32> to vector<8x8x4xf32>
    %26 = vector.extract_strided_slice %17 {offsets = [2, 0, 0], sizes = [8, 8, 4], strides = [1, 1, 1]} : vector<10x8x4xf32> to vector<8x8x4xf32>
    %27 = vector.extract_strided_slice %14 {offsets = [2, 0, 0], sizes = [8, 8, 4], strides = [1, 1, 1]} : vector<10x8x4xf32> to vector<8x8x4xf32>
    %28 = vector.extract_strided_slice %19 {offsets = [2, 0, 0], sizes = [8, 8, 4], strides = [1, 1, 1]} : vector<10x8x4xf32> to vector<8x8x4xf32>
    %29 = tpu.concatenate %20, %21, %22, %23, %24, %25, %26, %27, %28 in 2 : vector<8x8x4xf32>, vector<8x8x4xf32>, vector<8x8x4xf32>, vector<8x8x4xf32>, vector<8x8x4xf32>, vector<8x8x4xf32>, vector<8x8x4xf32>, vector<8x8x4xf32>, vector<8x8x4xf32> -> vector<8x8x36xf32>
    %30 = vector.shape_cast %29 : vector<8x8x36xf32> to vector<64x36xf32>
    %c0_9 = arith.constant 0 : index
    %c0_10 = arith.constant 0 : index
    %31 = vector.load %arg4[%c0_9, %c0_10] : memref<36x8xf32, #tpu.memory_space<vmem>>, vector<36x8xf32>
    %cst_11 = arith.constant dense<0.000000e+00> : vector<64x8xf32>
    %32 = tpu.matmul %30, %31, %cst_11 {dimension_numbers = #tpu.dot_dimension_numbers<[1], [0], [0], [1], [0, 0, 1, 1], [], []>} : vector<64x36xf32>, vector<36x8xf32>, vector<64x8xf32> -> vector<64x8xf32>
    %33 = vector.shape_cast %32 : vector<64x8xf32> to vector<8x8x8xf32>
    %c0_12 = arith.constant 0 : index
    %c0_13 = arith.constant 0 : index
    %c0_14 = arith.constant 0 : index
    %c0_15 = arith.constant 0 : index
    %34 = vector.load %arg5[%c0_12, %c0_13, %c0_14, %c0_15] : memref<1x8x8x8xf32, #tpu.memory_space<vmem>>, vector<1x8x8x8xf32>
    %35 = vector.shape_cast %34 : vector<1x8x8x8xf32> to vector<8x8x8xf32>
    %36 = vector.shape_cast %33 : vector<8x8x8xf32> to vector<1x8x8x8xf32>
    tpu.vector_store %arg5[%c0_12, %c0_13, %c0_14, %c0_15], %36 {strides = array<i32>} : memref<1x8x8x8xf32, #tpu.memory_space<vmem>>, vector<1x8x8x8xf32>,
    %cst_16 = arith.constant dense<0.000000e+00> : vector<8xf32>
    %37 = vector.multi_reduction <add>, %32, %cst_16 [0] : vector<64x8xf32> to vector<8xf32>
    %38 = vector.shape_cast %37 : vector<8xf32> to vector<1x8xf32>
    %39 = arith.mulf %32, %32 : vector<64x8xf32>
    %cst_17 = arith.constant dense<0.000000e+00> : vector<8xf32>
    %40 = vector.multi_reduction <add>, %39, %cst_17 [0] : vector<64x8xf32> to vector<8xf32>
    %41 = vector.shape_cast %40 : vector<8xf32> to vector<1x8xf32>
    %42 = tpu.concatenate %38, %41 in 0 : vector<1x8xf32>, vector<1x8xf32> -> vector<2x8xf32>
    %c0_18 = arith.constant 0 : index
    %c0_19 = arith.constant 0 : index
    %c0_20 = arith.constant 0 : index
    %c0_21 = arith.constant 0 : index
    %43 = vector.load %arg6[%c0_18, %c0_19, %c0_20, %c0_21] : memref<1x1x2x8xf32, #tpu.memory_space<vmem>>, vector<1x1x2x8xf32>
    %44 = vector.shape_cast %43 : vector<1x1x2x8xf32> to vector<2x8xf32>
    %45 = vector.shape_cast %42 : vector<2x8xf32> to vector<1x1x2x8xf32>
    tpu.vector_store %arg6[%c0_18, %c0_19, %c0_20, %c0_21], %45 {strides = array<i32>} : memref<1x1x2x8xf32, #tpu.memory_space<vmem>>, vector<1x1x2x8xf32>,
    return
  }
  func.func @transform_0(%arg0: i32, %arg1: i32) -> (i32, i32, i32, i32, i32) {
    %c0_i32 = arith.constant 0 : i32
    %c0_i32_0 = arith.constant 0 : i32
    %c0_i32_1 = arith.constant 0 : i32
    %c0_i32_2 = arith.constant 0 : i32
    return %arg0, %arg1, %c0_i32, %c0_i32_0, %c0_i32_1 : i32, i32, i32, i32, i32
  }
  func.func @transform_1(%arg0: i32, %arg1: i32) -> (i32, i32, i32, i32, i32) {
    %c0_i32 = arith.constant 0 : i32
    %c0_i32_0 = arith.constant 0 : i32
    %c0_i32_1 = arith.constant 0 : i32
    %c0_i32_2 = arith.constant 0 : i32
    return %arg0, %arg1, %c0_i32, %c0_i32_0, %c0_i32_1 : i32, i32, i32, i32, i32
  }
  func.func @transform_2(%arg0: i32, %arg1: i32) -> (i32, i32) {
    %c0_i32 = arith.constant 0 : i32
    %c0_i32_0 = arith.constant 0 : i32
    %c0_i32_1 = arith.constant 0 : i32
    return %c0_i32, %c0_i32_0 : i32, i32
  }
  func.func @transform_3(%arg0: i32, %arg1: i32) -> (i32, i32, i32, i32) {
    %c0_i32 = arith.constant 0 : i32
    %c0_i32_0 = arith.constant 0 : i32
    %c0_i32_1 = arith.constant 0 : i32
    return %arg0, %arg1, %c0_i32, %c0_i32_0 : i32, i32, i32, i32
  }
  func.func @transform_4(%arg0: i32, %arg1: i32) -> (i32, i32, i32, i32) {
    %c0_i32 = arith.constant 0 : i32
    %c0_i32_0 = arith.constant 0 : i32
    %c0_i32_1 = arith.constant 0 : i32
    return %arg0, %arg1, %c0_i32, %c0_i32_0 : i32, i32, i32, i32
  }
}

module attributes {stable_mosaic.version = 11 : i64} {
  func.func @_bn_silu_kernel(%arg0: i32, %arg1: i32, %arg2: memref<1x8x8x8xf32, #tpu.memory_space<vmem>>, %arg3: memref<1x8xf32, #tpu.memory_space<vmem>>, %arg4: memref<1x8xf32, #tpu.memory_space<vmem>>, %arg5: memref<1x8x8x8xf32, #tpu.memory_space<vmem>>) attributes {dimension_semantics = [#tpu.dimension_semantics<parallel>, #tpu.dimension_semantics<parallel>], iteration_bounds = array<i64: 2, 1>, scalar_prefetch = 0 : i64, scratch_operands = 0 : i64, tpu.core_type = #tpu.core_type<tc>, window_params = [{transform_indices = @transform_0, window_bounds = array<i64: 1, 8, 8, 8>}, {pipeline_mode = #tpu.pipeline_mode<synchronous>, transform_indices = @transform_1, window_bounds = array<i64: 1, 8>}, {pipeline_mode = #tpu.pipeline_mode<synchronous>, transform_indices = @transform_2, window_bounds = array<i64: 1, 8>}, {transform_indices = @transform_3, window_bounds = array<i64: 1, 8, 8, 8>}]} {
    %c0 = arith.constant 0 : index
    %c0_0 = arith.constant 0 : index
    %c0_1 = arith.constant 0 : index
    %c0_2 = arith.constant 0 : index
    %0 = vector.load %arg2[%c0, %c0_0, %c0_1, %c0_2] : memref<1x8x8x8xf32, #tpu.memory_space<vmem>>, vector<1x8x8x8xf32>
    %c0_3 = arith.constant 0 : index
    %c0_4 = arith.constant 0 : index
    %1 = vector.load %arg3[%c0_3, %c0_4] : memref<1x8xf32, #tpu.memory_space<vmem>>, vector<1x8xf32>
    %2 = vector.shape_cast %1 : vector<1x8xf32> to vector<1x1x1x8xf32>
    %3 = vector.broadcast %2 : vector<1x1x1x8xf32> to vector<1x8x8x8xf32>
    %4 = arith.mulf %0, %3 : vector<1x8x8x8xf32>
    %c0_5 = arith.constant 0 : index
    %c0_6 = arith.constant 0 : index
    %5 = vector.load %arg4[%c0_5, %c0_6] : memref<1x8xf32, #tpu.memory_space<vmem>>, vector<1x8xf32>
    %6 = vector.shape_cast %5 : vector<1x8xf32> to vector<1x1x1x8xf32>
    %7 = vector.broadcast %6 : vector<1x1x1x8xf32> to vector<1x8x8x8xf32>
    %8 = arith.addf %4, %7 : vector<1x8x8x8xf32>
    %9 = arith.negf %8 : vector<1x8x8x8xf32>
    %10 = math.exp %9 : vector<1x8x8x8xf32>
    %cst = arith.constant 1.000000e+00 : f32
    %11 = vector.broadcast %cst : f32 to vector<1x8x8x8xf32>
    %12 = arith.addf %11, %10 : vector<1x8x8x8xf32>
    %13 = arith.divf %11, %12 : vector<1x8x8x8xf32>
    %14 = arith.mulf %8, %13 : vector<1x8x8x8xf32>
    %c0_7 = arith.constant 0 : index
    %c0_8 = arith.constant 0 : index
    %c0_9 = arith.constant 0 : index
    %c0_10 = arith.constant 0 : index
    %15 = vector.load %arg5[%c0_7, %c0_8, %c0_9, %c0_10] : memref<1x8x8x8xf32, #tpu.memory_space<vmem>>, vector<1x8x8x8xf32>
    tpu.vector_store %arg5[%c0_7, %c0_8, %c0_9, %c0_10], %14 {strides = array<i32>} : memref<1x8x8x8xf32, #tpu.memory_space<vmem>>, vector<1x8x8x8xf32>,
    return
  }
  func.func @transform_0(%arg0: i32, %arg1: i32) -> (i32, i32, i32, i32) {
    %c0_i32 = arith.constant 0 : i32
    %c0_i32_0 = arith.constant 0 : i32
    %c0_i32_1 = arith.constant 0 : i32
    return %arg0, %arg1, %c0_i32, %c0_i32_0 : i32, i32, i32, i32
  }
  func.func @transform_1(%arg0: i32, %arg1: i32) -> (i32, i32) {
    %c0_i32 = arith.constant 0 : i32
    %c0_i32_0 = arith.constant 0 : i32
    %c0_i32_1 = arith.constant 0 : i32
    return %c0_i32, %c0_i32_0 : i32, i32
  }
  func.func @transform_2(%arg0: i32, %arg1: i32) -> (i32, i32) {
    %c0_i32 = arith.constant 0 : i32
    %c0_i32_0 = arith.constant 0 : i32
    %c0_i32_1 = arith.constant 0 : i32
    return %c0_i32, %c0_i32_0 : i32, i32
  }
  func.func @transform_3(%arg0: i32, %arg1: i32) -> (i32, i32, i32, i32) {
    %c0_i32 = arith.constant 0 : i32
    %c0_i32_0 = arith.constant 0 : i32
    %c0_i32_1 = arith.constant 0 : i32
    return %arg0, %arg1, %c0_i32, %c0_i32_0 : i32, i32, i32, i32
  }
}

</mosaic_0001>

<llo_original>
// kernel: down_forward.3
$region0: #{down_forward.3}
  #allocation0 [shape = 'u32[]', space=smem, size = 0x4, offset = 0x4, fixed_abs, tag = 'smem constant byte address 0x4 - core index']
  #allocation1 [shape = 'u32[72,128]{1,0:T(1,128)}', space=vmem, size = 0x9000, scoped, tag = 'internal scratch']
  %s0 = inlined_call_operand.vmem [shape: f32[2,8,8,8], index: 0, kind: input, shape index: {}, may-alias: {0,3}]
  %s1 = inlined_call_operand.vmem [shape: f32[1,8], index: 1, kind: input, shape index: {}]
  %s2 = inlined_call_operand.vmem [shape: f32[1,8], index: 2, kind: input, shape index: {}]
  %s3 = inlined_call_operand.vmem [shape: f32[2,8,8,8], index: 3, kind: output, shape index: {}, may-alias: {0,3}]
  %s4 = sld [smem:[#allocation0]]
  $region45: #{down_forward.3} parent=0
    _
  %s6 = ssub.s32 1, %s4
  %s7 = scalar_select 0, %s6, %s4
  loop: start=0, step=1, limit=4
  $region2: #{down_forward.3} parent=0 // loop_pre_header
    _
  $region3: #{down_forward.3} parent=0 // loop_header
    %s9 = sphi 0, %s13
    %p10 = scmp.ge.s32.totalorder %s9, 4
    %s16 = sphi 0, %s28
    %s17 = sphi 0, %s24
    %s18 = sphi 0, %s16
    %s19 = sphi 0, %s17
    %s20 = sphi 0, %s18
    %s21 = sphi 0, %s19
    %s33 = sphi 0, %s35
    %s36 = sphi 0, %s33
    %s37 = sphi 0, %s36
    %s53 = sphi 0, %s37
    %s57 = sphi 0, %s57
    %s59 = sphi 0, %s57
    %s60 = sphi 0, %s59
    %s74 = sphi 0, %s60
    %s78 = sphi 0, %s78
    %s80 = sphi 0, %s78
    %s81 = sphi 0, %s80
    %s95 = sphi 0, %s81
    %s103 = sphi 0, %s105
    %s106 = sphi 0, %s103
    %s107 = sphi 0, %s106
    %s123 = sphi 0, %s107
  $region4: #{down_forward.3} parent=0 // loop_header_branch
    %12 = sbr.rel (%p10) target = $region8
  $region5: #{down_forward.3} parent=0 // loop_body
    %s14 = ssub.s32 %s9, 1
    %s15 = ssub.s32 %s9, 2
    %s22 = sadd.s32 1, %s17
    %p23 = scmp.ge.s32.totalorder %s22, 1
    %s24 = scalar_select %p23, 0, %s22
    %s25 = sadd.s32 1, %s16
    %s26 = scalar_select %p23, %s25, %s16
    %p27 = scmp.ge.s32.totalorder %s26, 2
    %s28 = scalar_select %p27, 0, %s26
    %s29 = ssub.s32 %s16, %s28
    %s30 = ssub.s32 %s17, %s24
    %s31 = sor.u32 %s29, %s30
    %p32 = scmp.eq.s32.totalorder %s31, 0
    %s34 = sadd.s32 %s33, 1
    %s35 = scalar_select %p32, %s33, %s34
    %p38 = pneg %p32
    %p39 = scmp.eq.s32.totalorder %s9, 1
    %p40 = por %p38, %p39
    %p41 = scmp.ne.s32.totalorder %s33, %s36
    %p42 = scmp.eq.s32.totalorder %s9, 0
    %p43 = por %p41, %p42
    %p44 = scmp.ne.s32.totalorder %s33, %s36
    %p45 = scmp.eq.s32.totalorder %s14, 1
    %p46 = por %p44, %p45
    %p47 = scmp.ne.s32.totalorder %s36, %s37
    %p48 = scmp.eq.s32.totalorder %s14, 0
    %p49 = por %p47, %p48
    %p50 = scmp.ne.s32.totalorder %s36, %s37
    %p51 = scmp.eq.s32.totalorder %s15, 1
    %p52 = por %p50, %p51
    %p54 = scmp.ne.s32.totalorder %s37, %s53
    %p55 = scmp.eq.s32.totalorder %s15, 0
    %p56 = por %p54, %p55
    %s58 = sadd.s32 %s57, 1
    %p61 = scmp.eq.s32.totalorder %s9, 1
    %p62 = scmp.ne.s32.totalorder %s57, %s59
    %p63 = scmp.eq.s32.totalorder %s9, 0
    %p64 = por %p62, %p63
    %p65 = scmp.ne.s32.totalorder %s57, %s59
    %p66 = scmp.eq.s32.totalorder %s14, 1
    %p67 = por %p65, %p66
    %p68 = scmp.ne.s32.totalorder %s59, %s60
    %p69 = scmp.eq.s32.totalorder %s14, 0
    %p70 = por %p68, %p69
    %p71 = scmp.ne.s32.totalorder %s59, %s60
    %p72 = scmp.eq.s32.totalorder %s15, 1
    %p73 = por %p71, %p72
    %p75 = scmp.ne.s32.totalorder %s60, %s74
    %p76 = scmp.eq.s32.totalorder %s15, 0
    %p77 = por %p75, %p76
    %s79 = sadd.s32 %s78, 1
    %p82 = scmp.eq.s32.totalorder %s9, 1
    %p83 = scmp.ne.s32.totalorder %s78, %s80
    %p84 = scmp.eq.s32.totalorder %s9, 0
    %p85 = por %p83, %p84
    %p86 = scmp.ne.s32.totalorder %s78, %s80
    %p87 = scmp.eq.s32.totalorder %s14, 1
    %p88 = por %p86, %p87
    %p89 = scmp.ne.s32.totalorder %s80, %s81
    %p90 = scmp.eq.s32.totalorder %s14, 0
    %p91 = por %p89, %p90
    %p92 = scmp.ne.s32.totalorder %s80, %s81
    %p93 = scmp.eq.s32.totalorder %s15, 1
    %p94 = por %p92, %p93
    %p96 = scmp.ne.s32.totalorder %s81, %s95
    %p97 = scmp.eq.s32.totalorder %s15, 0
    %p98 = por %p96, %p97
    %s99 = ssub.s32 %s16, %s28
    %s100 = ssub.s32 %s17, %s24
    %s101 = sor.u32 %s99, %s100
    %p102 = scmp.eq.s32.totalorder %s101, 0
    %s104 = sadd.s32 %s103, 1
    %s105 = scalar_select %p102, %s103, %s104
    %p108 = pneg %p102
    %p109 = scmp.eq.s32.totalorder %s9, 1
    %p110 = por %p108, %p109
    %p111 = scmp.ne.s32.totalorder %s103, %s106
    %p112 = scmp.eq.s32.totalorder %s9, 0
    %p113 = por %p111, %p112
    %p114 = scmp.ne.s32.totalorder %s103, %s106
    %p115 = scmp.eq.s32.totalorder %s14, 1
    %p116 = por %p114, %p115
    %p117 = scmp.ne.s32.totalorder %s106, %s107
    %p118 = scmp.eq.s32.totalorder %s14, 0
    %p119 = por %p117, %p118
    %p120 = scmp.ne.s32.totalorder %s106, %s107
    %p121 = scmp.eq.s32.totalorder %s15, 1
    %p122 = por %p120, %p121
    %p124 = scmp.ne.s32.totalorder %s107, %s123
    %p125 = scmp.eq.s32.totalorder %s15, 0
    %p126 = por %p124, %p125
    %p127 = scmp.le.s32.totalorder 1, %s9
    %p128 = scmp.lt.s32.totalorder %s9, 3
    %p129 = pnand %p127, %p128
    %p130 = pneg %p129
    // Predicated region
    $region9: #{down_forward.3} parent=5 // pred_check
      _
    $region10: #{down_forward.3} parent=5 // pred_check_branch
      %132 = sbr.rel (%p129) target = $region12
    $region11: #{down_forward.3} parent=5 // pred_region
      %s133 = ssub.s32 %s9, 1
      // Predicated region
      $region13: #{down_forward.3} parent=11 // pred_check
        %p134 = pneg %p70
      $region14: #{down_forward.3} parent=11 // pred_check_branch
        %136 = sbr.rel (%p134) target = $region16
      $region15: #{down_forward.3} parent=11 // pred_region
        _
      $region16: #{down_forward.3} parent=11 // pred_fallthru
        _
      // Predicated region
      $region17: #{down_forward.3} parent=11 // pred_check
        %p137 = pneg %p91
      $region18: #{down_forward.3} parent=11 // pred_check_branch
        %139 = sbr.rel (%p137) target = $region20
      $region19: #{down_forward.3} parent=11 // pred_region
        _
      $region20: #{down_forward.3} parent=11 // pred_fallthru
        _
    $region12: #{down_forward.3} parent=5 // pred_fallthru
      _
    %p140 = scmp.lt.s32.totalorder %s9, 2
    // Predicated region
    $region21: #{down_forward.3} parent=5 // pred_check
      %p141 = pneg %p140
    $region22: #{down_forward.3} parent=5 // pred_check_branch
      %143 = sbr.rel (%p141) target = $region24
    $region23: #{down_forward.3} parent=5 // pred_region
      // Predicated region
      $region25: #{down_forward.3} parent=23 // pred_check
        %p144 = pneg %p43
      $region26: #{down_forward.3} parent=23 // pred_check_branch
        %146 = sbr.rel (%p144) target = $region28
      $region27: #{down_forward.3} parent=23 // pred_region
        %s147 = smul.u32 8, %s17
        %p148 = scmp.lt.s32.totalorder %s16, 1
        %s149 = scalar_select %p148, %s16, 1
        %p150 = scmp.lt.s32.totalorder %s147, 7
        %s151 = scalar_select %p150, %s147, 7
        %s152 = smul.addr %s149, 8
        %s153 = sadd.s32 %s151, %s152
        %s154 = smul.addr %s153, 8
        %s155 = scalar_lea.vmem %s0, %s154
        %s156 = smul.u32 8, %s17
      $region28: #{down_forward.3} parent=23 // pred_fallthru
        _
    $region24: #{down_forward.3} parent=5 // pred_fallthru
      _
    %p157 = scmp.le.s32.totalorder 1, %s9
    %p158 = scmp.lt.s32.totalorder %s9, 3
    %p159 = pnand %p157, %p158
    %p160 = pneg %p159
    // Predicated region
    $region29: #{down_forward.3} parent=5 // pred_check
      _
    $region30: #{down_forward.3} parent=5 // pred_check_branch
      %162 = sbr.rel (%p159) target = $region32
    $region31: #{down_forward.3} parent=5 // pred_region
      %s163 = ssub.s32 %s9, 1
      %s164 = smul.u32 8, %s19
      %p165 = scmp.lt.s32.totalorder %s18, 1
      %s166 = scalar_select %p165, %s18, 1
      %p167 = scmp.lt.s32.totalorder %s164, 7
      %s168 = scalar_select %p167, %s164, 7
      %s169 = smul.addr %s166, 8
      %s170 = sadd.s32 %s168, %s169
      %s171 = smul.addr %s170, 8
      %s172 = scalar_lea.vmem %s0, %s171
      %p173 = pneg %p49
      %p174 = pneg %p46
      %p175 = pneg %p70
      %p176 = pneg %p67
      %p177 = pneg %p91
      %p178 = pneg %p88
      %p179 = pneg %p119
      %p180 = pneg %p116
      %s181 = smul.u32 8, %s19
      %p182 = scmp.lt.s32.totalorder %s18, 1
      %s183 = scalar_select %p182, %s18, 1
      %p184 = scmp.lt.s32.totalorder %s181, 7
      %s185 = scalar_select %p184, %s181, 7
      %s186 = smul.addr %s183, 8
      %s187 = sadd.s32 %s185, %s186
      %s188 = smul.addr %s187, 8
      %s189 = scalar_lea.vmem %s3, %s188
      %s190 = smul.u32 8, %s19
      %p191 = scmp.lt.s32.totalorder %s18, 1
      %s192 = scalar_select %p191, %s18, 1
      %p193 = scmp.lt.s32.totalorder %s190, 7
      %s194 = scalar_select %p193, %s190, 7
      %s195 = smul.addr %s192, 8
      %s196 = sadd.s32 %s194, %s195
      %s197 = smul.addr %s196, 8
      %s198 = scalar_lea.vmem %s0, %s197
      %s199 = smul.u32 8, %s19
      %s200 = smul.u32 8, %s19
      %p201 = scmp.lt.s32.totalorder %s18, 1
      %s202 = scalar_select %p201, %s18, 1
      %p203 = scmp.lt.s32.totalorder %s200, 7
      %s204 = scalar_select %p203, %s200, 7
      %s205 = smul.addr %s202, 8
      %s206 = sadd.s32 %s204, %s205
      %s207 = smul.addr %s206, 8
      %s208 = scalar_lea.vmem %s3, %s207
      %s209 = smul.u32 8, %s19
      %v210 = vld [vmem:[%s198] sm:$0xff]
      %v211 = vld [vmem:[%s198 + $0x8] sm:$0xff]
      %v212 = vld [vmem:[%s198 + $0x10] sm:$0xff]
      %v213 = vld [vmem:[%s198 + $0x18] sm:$0xff]
      %v214 = vld [vmem:[%s198 + $0x20] sm:$0xff]
      %v215 = vld [vmem:[%s198 + $0x28] sm:$0xff]
      %v216 = vld [vmem:[%s198 + $0x30] sm:$0xff]
      %v217 = vld [vmem:[%s198 + $0x38] sm:$0xff]
      %v218 = vld [vmem:[%s1] sm:$0x1]
      %v220 = vperm.slane %v218, 0
      %v222 = vmul.f32 %v210, %v220
      %v223 = vmul.f32 %v211, %v220
      %v224 = vmul.f32 %v212, %v220
      %v225 = vmul.f32 %v213, %v220
      %v226 = vmul.f32 %v214, %v220
      %v227 = vmul.f32 %v215, %v220
      %v228 = vmul.f32 %v216, %v220
      %v229 = vmul.f32 %v217, %v220
      %v230 = vld [vmem:[%s2] sm:$0x1]
      %v232 = vperm.slane %v230, 0
      %v234 = vadd.f32 %v222, %v232
      %v235 = vadd.f32 %v223, %v232
      %v236 = vadd.f32 %v224, %v232
      %v237 = vadd.f32 %v225, %v232
      %v238 = vadd.f32 %v226, %v232
      %v239 = vadd.f32 %v227, %v232
      %v240 = vadd.f32 %v228, %v232
      %v241 = vadd.f32 %v229, %v232
      %v242 = vxor.u32 %v234, 2147483648
      %v243 = vxor.u32 %v235, 2147483648
      %v244 = vxor.u32 %v236, 2147483648
      %v245 = vxor.u32 %v237, 2147483648
      %v246 = vxor.u32 %v238, 2147483648
      %v247 = vxor.u32 %v239, 2147483648
      %v248 = vxor.u32 %v240, 2147483648
      %v249 = vxor.u32 %v241, 2147483648
      %v250 = vmul.f32 %v242, 1.442695
      %v251 = vpow.pop %v250
      %v252 = vmul.f32 %v243, 1.442695
      %v253 = vpow.pop %v252
      %v254 = vmul.f32 %v244, 1.442695
      %v255 = vpow.pop %v254
      %v256 = vmul.f32 %v245, 1.442695
      %v257 = vpow.pop %v256
      %v258 = vmul.f32 %v246, 1.442695
      %v259 = vpow.pop %v258
      %v260 = vmul.f32 %v247, 1.442695
      %v261 = vpow.pop %v260
      %v262 = vmul.f32 %v248, 1.442695
      %v263 = vpow.pop %v262
      %v264 = vmul.f32 %v249, 1.442695
      %v265 = vpow.pop %v264
      %v266 = vadd.f32 %v251, 1.0
      %v267 = vadd.f32 %v253, 1.0
      %v268 = vadd.f32 %v255, 1.0
      %v269 = vadd.f32 %v257, 1.0
      %v270 = vadd.f32 %v259, 1.0
      %v271 = vadd.f32 %v261, 1.0
      %v272 = vadd.f32 %v263, 1.0
      %v273 = vadd.f32 %v265, 1.0
      %v274 = vrcp.pop %v266
      %v275 = vmul.f32 %v266, %v274
      %v276 = vsub.f32 1.0, %v275
      %v277 = vmul.f32 %v274, %v276
      %v278 = vadd.f32 %v274, %v277
      %vm279 = vweird.f32 %v266
      %vm280 = vweird.f32 %v274
      %vm281 = vmor %vm279, %vm280
      %v282 = vsel %vm281, %v274, %v278
      %v283 = vand.u32 2147483647, %v266
      %vm284 = vcmp.eq.f32.partialorder %v283, 8.507059e+37
      %v285 = vand.u32 %v266, 2147483648
      %v286 = vor.u32 1.1754944e-38, %v285
      %v287 = vsel %vm284, %v286, %v282
      %v288 = vmul.f32 1.0, %v287
      %v289 = vrcp.pop %v267
      %v290 = vmul.f32 %v267, %v289
      %v291 = vsub.f32 1.0, %v290
      %v292 = vmul.f32 %v289, %v291
      %v293 = vadd.f32 %v289, %v292
      %vm294 = vweird.f32 %v267
      %vm295 = vweird.f32 %v289
      %vm296 = vmor %vm294, %vm295
      %v297 = vsel %vm296, %v289, %v293
      %v298 = vand.u32 2147483647, %v267
      %vm299 = vcmp.eq.f32.partialorder %v298, 8.507059e+37
      %v300 = vand.u32 %v267, 2147483648
      %v301 = vor.u32 1.1754944e-38, %v300
      %v302 = vsel %vm299, %v301, %v297
      %v303 = vmul.f32 1.0, %v302
      %v304 = vrcp.pop %v268
      %v305 = vmul.f32 %v268, %v304
      %v306 = vsub.f32 1.0, %v305
      %v307 = vmul.f32 %v304, %v306
      %v308 = vadd.f32 %v304, %v307
      %vm309 = vweird.f32 %v268
      %vm310 = vweird.f32 %v304
      %vm311 = vmor %vm309, %vm310
      %v312 = vsel %vm311, %v304, %v308
      %v313 = vand.u32 2147483647, %v268
      %vm314 = vcmp.eq.f32.partialorder %v313, 8.507059e+37
      %v315 = vand.u32 %v268, 2147483648
      %v316 = vor.u32 1.1754944e-38, %v315
      %v317 = vsel %vm314, %v316, %v312
      %v318 = vmul.f32 1.0, %v317
      %v319 = vrcp.pop %v269
      %v320 = vmul.f32 %v269, %v319
      %v321 = vsub.f32 1.0, %v320
      %v322 = vmul.f32 %v319, %v321
      %v323 = vadd.f32 %v319, %v322
      %vm324 = vweird.f32 %v269
      %vm325 = vweird.f32 %v319
      %vm326 = vmor %vm324, %vm325
      %v327 = vsel %vm326, %v319, %v323
      %v328 = vand.u32 2147483647, %v269
      %vm329 = vcmp.eq.f32.partialorder %v328, 8.507059e+37
      %v330 = vand.u32 %v269, 2147483648
      %v331 = vor.u32 1.1754944e-38, %v330
      %v332 = vsel %vm329, %v331, %v327
      %v333 = vmul.f32 1.0, %v332
      %v334 = vrcp.pop %v270
      %v335 = vmul.f32 %v270, %v334
      %v336 = vsub.f32 1.0, %v335
      %v337 = vmul.f32 %v334, %v336
      %v338 = vadd.f32 %v334, %v337
      %vm339 = vweird.f32 %v270
      %vm340 = vweird.f32 %v334
      %vm341 = vmor %vm339, %vm340
      %v342 = vsel %vm341, %v334, %v338
      %v343 = vand.u32 2147483647, %v270
      %vm344 = vcmp.eq.f32.partialorder %v343, 8.507059e+37
      %v345 = vand.u32 %v270, 2147483648
      %v346 = vor.u32 1.1754944e-38, %v345
      %v347 = vsel %vm344, %v346, %v342
      %v348 = vmul.f32 1.0, %v347
      %v349 = vrcp.pop %v271
      %v350 = vmul.f32 %v271, %v349
      %v351 = vsub.f32 1.0, %v350
      %v352 = vmul.f32 %v349, %v351
      %v353 = vadd.f32 %v349, %v352
      %vm354 = vweird.f32 %v271
      %vm355 = vweird.f32 %v349
      %vm356 = vmor %vm354, %vm355
      %v357 = vsel %vm356, %v349, %v353
      %v358 = vand.u32 2147483647, %v271
      %vm359 = vcmp.eq.f32.partialorder %v358, 8.507059e+37
      %v360 = vand.u32 %v271, 2147483648
      %v361 = vor.u32 1.1754944e-38, %v360
      %v362 = vsel %vm359, %v361, %v357
      %v363 = vmul.f32 1.0, %v362
      %v364 = vrcp.pop %v272
      %v365 = vmul.f32 %v272, %v364
      %v366 = vsub.f32 1.0, %v365
      %v367 = vmul.f32 %v364, %v366
      %v368 = vadd.f32 %v364, %v367
      %vm369 = vweird.f32 %v272
      %vm370 = vweird.f32 %v364
      %vm371 = vmor %vm369, %vm370
      %v372 = vsel %vm371, %v364, %v368
      %v373 = vand.u32 2147483647, %v272
      %vm374 = vcmp.eq.f32.partialorder %v373, 8.507059e+37
      %v375 = vand.u32 %v272, 2147483648
      %v376 = vor.u32 1.1754944e-38, %v375
      %v377 = vsel %vm374, %v376, %v372
      %v378 = vmul.f32 1.0, %v377
      %v379 = vrcp.pop %v273
      %v380 = vmul.f32 %v273, %v379
      %v381 = vsub.f32 1.0, %v380
      %v382 = vmul.f32 %v379, %v381
      %v383 = vadd.f32 %v379, %v382
      %vm384 = vweird.f32 %v273
      %vm385 = vweird.f32 %v379
      %vm386 = vmor %vm384, %vm385
      %v387 = vsel %vm386, %v379, %v383
      %v388 = vand.u32 2147483647, %v273
      %vm389 = vcmp.eq.f32.partialorder %v388, 8.507059e+37
      %v390 = vand.u32 %v273, 2147483648
      %v391 = vor.u32 1.1754944e-38, %v390
      %v392 = vsel %vm389, %v391, %v387
      %v393 = vmul.f32 1.0, %v392
      %v394 = vmul.f32 %v234, %v288
      %v395 = vmul.f32 %v235, %v303
      %v396 = vmul.f32 %v236, %v318
      %v397 = vmul.f32 %v237, %v333
      %v398 = vmul.f32 %v238, %v348
      %v399 = vmul.f32 %v239, %v363
      %v400 = vmul.f32 %v240, %v378
      %v401 = vmul.f32 %v241, %v393
      %vm402 = vcmask 64512
      %403 = vst.msk [vmem:[%s208] sm:$0xff] %vm402, %v394
      %404 = vst.msk [vmem:[%s208 + $0x8] sm:$0xff] %vm402, %v395
      %405 = vst.msk [vmem:[%s208 + $0x10] sm:$0xff] %vm402, %v396
      %406 = vst.msk [vmem:[%s208 + $0x18] sm:$0xff] %vm402, %v397
      %407 = vst.msk [vmem:[%s208 + $0x20] sm:$0xff] %vm402, %v398
      %408 = vst.msk [vmem:[%s208 + $0x28] sm:$0xff] %vm402, %v399
      %409 = vst.msk [vmem:[%s208 + $0x30] sm:$0xff] %vm402, %v400
      %410 = vst.msk [vmem:[%s208 + $0x38] sm:$0xff] %vm402, %v401
      %s411 = smul.u32 8, %s19
      %p412 = scmp.lt.s32.totalorder %s18, 1
      %s413 = scalar_select %p412, %s18, 1
      %p414 = scmp.lt.s32.totalorder %s411, 7
      %s415 = scalar_select %p414, %s411, 7
      %s416 = smul.addr %s413, 8
      %s417 = sadd.s32 %s415, %s416
      %s418 = smul.addr %s417, 8
      %s419 = scalar_lea.vmem %s3, %s418
      // Predicated region
      $region33: #{down_forward.3} parent=31 // pred_check
        %p420 = pneg %p116
      $region34: #{down_forward.3} parent=31 // pred_check_branch
        %422 = sbr.rel (%p420) target = $region36
      $region35: #{down_forward.3} parent=31 // pred_region
        %s423 = smul.u32 8, %s19
      $region36: #{down_forward.3} parent=31 // pred_fallthru
        _
    $region32: #{down_forward.3} parent=5 // pred_fallthru
      _
    %p424 = scmp.le.s32.totalorder 2, %s9
    // Predicated region
    $region37: #{down_forward.3} parent=5 // pred_check
      %p425 = pneg %p424
    $region38: #{down_forward.3} parent=5 // pred_check_branch
      %427 = sbr.rel (%p425) target = $region40
    $region39: #{down_forward.3} parent=5 // pred_region
      %s428 = ssub.s32 %s9, 2
      // Predicated region
      $region41: #{down_forward.3} parent=39 // pred_check
        %p429 = pneg %p122
      $region42: #{down_forward.3} parent=39 // pred_check_branch
        %431 = sbr.rel (%p429) target = $region44
      $region43: #{down_forward.3} parent=39 // pred_region
        %s432 = smul.u32 8, %s21
        %p433 = scmp.lt.s32.totalorder %s20, 1
        %s434 = scalar_select %p433, %s20, 1
        %p435 = scmp.lt.s32.totalorder %s432, 7
        %s436 = scalar_select %p435, %s432, 7
        %s437 = smul.addr %s434, 8
        %s438 = sadd.s32 %s436, %s437
        %s439 = smul.addr %s438, 8
        %s440 = scalar_lea.vmem %s3, %s439
      $region44: #{down_forward.3} parent=39 // pred_fallthru
        _
    $region40: #{down_forward.3} parent=5 // pred_fallthru
      _
  $region6: #{down_forward.3} parent=0 // loop_footer
    %s13 = sadd.s32 1, %s9
  $region7: #{down_forward.3} parent=0 // loop_footer_branch
    %8 = sbr.rel target = $region3
  $region8: #{down_forward.3} parent=0 // loop_exit
    _

// kernel: down_forward.2
$region0: #{down_forward.2}
  #allocation0 [shape = 'u32[]', space=smem, size = 0x4, offset = 0x4, fixed_abs, tag = 'smem constant byte address 0x4 - core index']
  #allocation1 [shape = 'u32[72,128]{1,0:T(1,128)}', space=vmem, size = 0x9000, scoped, tag = 'internal scratch']
  %s0 = inlined_call_operand.vmem [shape: f32[2,8,2,8,8], index: 0, kind: input, shape index: {}]
  %s1 = inlined_call_operand.vmem [shape: f32[2,1,2,8,4], index: 1, kind: input, shape index: {}]
  %s2 = inlined_call_operand.vmem [shape: f32[36,8], index: 2, kind: input, shape index: {}]
  %s3 = inlined_call_operand.vmem [shape: f32[2,8,8,8], index: 3, kind: output, shape index: {0}]
  %s4 = inlined_call_operand.vmem [shape: f32[2,1,2,8], index: 4, kind: output, shape index: {1}]
  %5 = xla_tuple %s3, %s4
  %s6 = sld [smem:[#allocation0]]
  $region53: #{down_forward.2} parent=0
    _
  %s8 = ssub.s32 1, %s6
  %s9 = scalar_select 0, %s8, %s6
  loop: start=0, step=1, limit=4
  $region2: #{down_forward.2} parent=0 // loop_pre_header
    _
  $region3: #{down_forward.2} parent=0 // loop_header
    %s11 = sphi 0, %s15
    %p12 = scmp.ge.s32.totalorder %s11, 4
    %s18 = sphi 0, %s30
    %s19 = sphi 0, %s26
    %s20 = sphi 0, %s18
    %s21 = sphi 0, %s19
    %s22 = sphi 0, %s20
    %s23 = sphi 0, %s21
    %s35 = sphi 0, %s37
    %s38 = sphi 0, %s35
    %s39 = sphi 0, %s38
    %s55 = sphi 0, %s39
    %s63 = sphi 0, %s65
    %s66 = sphi 0, %s63
    %s67 = sphi 0, %s66
    %s83 = sphi 0, %s67
    %s87 = sphi 0, %s87
    %s89 = sphi 0, %s87
    %s90 = sphi 0, %s89
    %s104 = sphi 0, %s90
    %s112 = sphi 0, %s114
    %s115 = sphi 0, %s112
    %s116 = sphi 0, %s115
    %s132 = sphi 0, %s116
    %s140 = sphi 0, %s142
    %s143 = sphi 0, %s140
    %s144 = sphi 0, %s143
    %s160 = sphi 0, %s144
  $region4: #{down_forward.2} parent=0 // loop_header_branch
    %14 = sbr.rel (%p12) target = $region8
  $region5: #{down_forward.2} parent=0 // loop_body
    %s16 = ssub.s32 %s11, 1
    %s17 = ssub.s32 %s11, 2
    %s24 = sadd.s32 1, %s19
    %p25 = scmp.ge.s32.totalorder %s24, 1
    %s26 = scalar_select %p25, 0, %s24
    %s27 = sadd.s32 1, %s18
    %s28 = scalar_select %p25, %s27, %s18
    %p29 = scmp.ge.s32.totalorder %s28, 2
    %s30 = scalar_select %p29, 0, %s28
    %s31 = ssub.s32 %s18, %s30
    %s32 = ssub.s32 %s19, %s26
    %s33 = sor.u32 %s31, %s32
    %p34 = scmp.eq.s32.totalorder %s33, 0
    %s36 = sadd.s32 %s35, 1
    %s37 = scalar_select %p34, %s35, %s36
    %p40 = pneg %p34
    %p41 = scmp.eq.s32.totalorder %s11, 1
    %p42 = por %p40, %p41
    %p43 = scmp.ne.s32.totalorder %s35, %s38
    %p44 = scmp.eq.s32.totalorder %s11, 0
    %p45 = por %p43, %p44
    %p46 = scmp.ne.s32.totalorder %s35, %s38
    %p47 = scmp.eq.s32.totalorder %s16, 1
    %p48 = por %p46, %p47
    %p49 = scmp.ne.s32.totalorder %s38, %s39
    %p50 = scmp.eq.s32.totalorder %s16, 0
    %p51 = por %p49, %p50
    %p52 = scmp.ne.s32.totalorder %s38, %s39
    %p53 = scmp.eq.s32.totalorder %s17, 1
    %p54 = por %p52, %p53
    %p56 = scmp.ne.s32.totalorder %s39, %s55
    %p57 = scmp.eq.s32.totalorder %s17, 0
    %p58 = por %p56, %p57
    %s59 = ssub.s32 %s18, %s30
    %s60 = ssub.s32 %s19, %s26
    %s61 = sor.u32 %s59, %s60
    %p62 = scmp.eq.s32.totalorder %s61, 0
    %s64 = sadd.s32 %s63, 1
    %s65 = scalar_select %p62, %s63, %s64
    %p68 = pneg %p62
    %p69 = scmp.eq.s32.totalorder %s11, 1
    %p70 = por %p68, %p69
    %p71 = scmp.ne.s32.totalorder %s63, %s66
    %p72 = scmp.eq.s32.totalorder %s11, 0
    %p73 = por %p71, %p72
    %p74 = scmp.ne.s32.totalorder %s63, %s66
    %p75 = scmp.eq.s32.totalorder %s16, 1
    %p76 = por %p74, %p75
    %p77 = scmp.ne.s32.totalorder %s66, %s67
    %p78 = scmp.eq.s32.totalorder %s16, 0
    %p79 = por %p77, %p78
    %p80 = scmp.ne.s32.totalorder %s66, %s67
    %p81 = scmp.eq.s32.totalorder %s17, 1
    %p82 = por %p80, %p81
    %p84 = scmp.ne.s32.totalorder %s67, %s83
    %p85 = scmp.eq.s32.totalorder %s17, 0
    %p86 = por %p84, %p85
    %s88 = sadd.s32 %s87, 1
    %p91 = scmp.eq.s32.totalorder %s11, 1
    %p92 = scmp.ne.s32.totalorder %s87, %s89
    %p93 = scmp.eq.s32.totalorder %s11, 0
    %p94 = por %p92, %p93
    %p95 = scmp.ne.s32.totalorder %s87, %s89
    %p96 = scmp.eq.s32.totalorder %s16, 1
    %p97 = por %p95, %p96
    %p98 = scmp.ne.s32.totalorder %s89, %s90
    %p99 = scmp.eq.s32.totalorder %s16, 0
    %p100 = por %p98, %p99
    %p101 = scmp.ne.s32.totalorder %s89, %s90
    %p102 = scmp.eq.s32.totalorder %s17, 1
    %p103 = por %p101, %p102
    %p105 = scmp.ne.s32.totalorder %s90, %s104
    %p106 = scmp.eq.s32.totalorder %s17, 0
    %p107 = por %p105, %p106
    %s108 = ssub.s32 %s18, %s30
    %s109 = ssub.s32 %s19, %s26
    %s110 = sor.u32 %s108, %s109
    %p111 = scmp.eq.s32.totalorder %s110, 0
    %s113 = sadd.s32 %s112, 1
    %s114 = scalar_select %p111, %s112, %s113
    %p117 = pneg %p111
    %p118 = scmp.eq.s32.totalorder %s11, 1
    %p119 = por %p117, %p118
    %p120 = scmp.ne.s32.totalorder %s112, %s115
    %p121 = scmp.eq.s32.totalorder %s11, 0
    %p122 = por %p120, %p121
    %p123 = scmp.ne.s32.totalorder %s112, %s115
    %p124 = scmp.eq.s32.totalorder %s16, 1
    %p125 = por %p123, %p124
    %p126 = scmp.ne.s32.totalorder %s115, %s116
    %p127 = scmp.eq.s32.totalorder %s16, 0
    %p128 = por %p126, %p127
    %p129 = scmp.ne.s32.totalorder %s115, %s116
    %p130 = scmp.eq.s32.totalorder %s17, 1
    %p131 = por %p129, %p130
    %p133 = scmp.ne.s32.totalorder %s116, %s132
    %p134 = scmp.eq.s32.totalorder %s17, 0
    %p135 = por %p133, %p134
    %s136 = ssub.s32 %s18, %s30
    %s137 = ssub.s32 %s19, %s26
    %s138 = sor.u32 %s136, %s137
    %p139 = scmp.eq.s32.totalorder %s138, 0
    %s141 = sadd.s32 %s140, 1
    %s142 = scalar_select %p139, %s140, %s141
    %p145 = pneg %p139
    %p146 = scmp.eq.s32.totalorder %s11, 1
    %p147 = por %p145, %p146
    %p148 = scmp.ne.s32.totalorder %s140, %s143
    %p149 = scmp.eq.s32.totalorder %s11, 0
    %p150 = por %p148, %p149
    %p151 = scmp.ne.s32.totalorder %s140, %s143
    %p152 = scmp.eq.s32.totalorder %s16, 1
    %p153 = por %p151, %p152
    %p154 = scmp.ne.s32.totalorder %s143, %s144
    %p155 = scmp.eq.s32.totalorder %s16, 0
    %p156 = por %p154, %p155
    %p157 = scmp.ne.s32.totalorder %s143, %s144
    %p158 = scmp.eq.s32.totalorder %s17, 1
    %p159 = por %p157, %p158
    %p161 = scmp.ne.s32.totalorder %s144, %s160
    %p162 = scmp.eq.s32.totalorder %s17, 0
    %p163 = por %p161, %p162
    %p164 = scmp.le.s32.totalorder 1, %s11
    %p165 = scmp.lt.s32.totalorder %s11, 3
    %p166 = pnand %p164, %p165
    %p167 = pneg %p166
    // Predicated region
    $region9: #{down_forward.2} parent=5 // pred_check
      _
    $region10: #{down_forward.2} parent=5 // pred_check_branch
      %169 = sbr.rel (%p166) target = $region12
    $region11: #{down_forward.2} parent=5 // pred_region
      %s170 = ssub.s32 %s11, 1
      // Predicated region
      $region13: #{down_forward.2} parent=11 // pred_check
        %p171 = pneg %p100
      $region14: #{down_forward.2} parent=11 // pred_check_branch
        %173 = sbr.rel (%p171) target = $region16
      $region15: #{down_forward.2} parent=11 // pred_region
        _
      $region16: #{down_forward.2} parent=11 // pred_fallthru
        _
    $region12: #{down_forward.2} parent=5 // pred_fallthru
      _
    %p174 = scmp.lt.s32.totalorder %s11, 2
    // Predicated region
    $region17: #{down_forward.2} parent=5 // pred_check
      %p175 = pneg %p174
    $region18: #{down_forward.2} parent=5 // pred_check_branch
      %177 = sbr.rel (%p175) target = $region20
    $region19: #{down_forward.2} parent=5 // pred_region
      // Predicated region
      $region21: #{down_forward.2} parent=19 // pred_check
        %p178 = pneg %p45
      $region22: #{down_forward.2} parent=19 // pred_check_branch
        %180 = sbr.rel (%p178) target = $region24
      $region23: #{down_forward.2} parent=19 // pred_region
        %s181 = smul.u32 8, %s19
        %p182 = scmp.lt.s32.totalorder %s18, 1
        %s183 = scalar_select %p182, %s18, 1
        %p184 = scmp.lt.s32.totalorder %s181, 7
        %s185 = scalar_select %p184, %s181, 7
        %s186 = smul.addr %s185, 2
        %s187 = smul.addr %s183, 16
        %s188 = sadd.s32 %s186, %s187
        %s189 = smul.addr %s188, 8
        %s190 = scalar_lea.vmem %s0, %s189
        %s191 = smul.u32 8, %s19
      $region24: #{down_forward.2} parent=19 // pred_fallthru
        _
      // Predicated region
      $region25: #{down_forward.2} parent=19 // pred_check
        %p192 = pneg %p73
      $region26: #{down_forward.2} parent=19 // pred_check_branch
        %194 = sbr.rel (%p192) target = $region28
      $region27: #{down_forward.2} parent=19 // pred_region
        %p195 = scmp.lt.s32.totalorder %s18, 1
        %s196 = scalar_select %p195, %s18, 1
        %p197 = scmp.lt.s32.totalorder %s19, 0
        %s198 = scalar_select %p197, %s19, 0
        %s199 = smul.addr %s198, 2
        %s200 = smul.addr %s196, 2
        %s201 = sadd.s32 %s199, %s200
        %s202 = smul.addr %s201, 8
        %s203 = scalar_lea.vmem %s1, %s202
      $region28: #{down_forward.2} parent=19 // pred_fallthru
        _
    $region20: #{down_forward.2} parent=5 // pred_fallthru
      _
    %p204 = scmp.le.s32.totalorder 1, %s11
    %p205 = scmp.lt.s32.totalorder %s11, 3
    %p206 = pnand %p204, %p205
    %p207 = pneg %p206
    // Predicated region
    $region29: #{down_forward.2} parent=5 // pred_check
      _
    $region30: #{down_forward.2} parent=5 // pred_check_branch
      %209 = sbr.rel (%p206) target = $region32
    $region31: #{down_forward.2} parent=5 // pred_region
      %s210 = ssub.s32 %s11, 1
      %s211 = smul.u32 8, %s21
      %p212 = scmp.lt.s32.totalorder %s20, 1
      %s213 = scalar_select %p212, %s20, 1
      %p214 = scmp.lt.s32.totalorder %s211, 7
      %s215 = scalar_select %p214, %s211, 7
      %s216 = smul.addr %s215, 2
      %s217 = smul.addr %s213, 16
      %s218 = sadd.s32 %s216, %s217
      %s219 = smul.addr %s218, 8
      %s220 = scalar_lea.vmem %s0, %s219
      %p221 = pneg %p51
      %p222 = pneg %p48
      %p223 = scmp.lt.s32.totalorder %s20, 1
      %s224 = scalar_select %p223, %s20, 1
      %p225 = scmp.lt.s32.totalorder %s21, 0
      %s226 = scalar_select %p225, %s21, 0
      %s227 = smul.addr %s226, 2
      %s228 = smul.addr %s224, 2
      %s229 = sadd.s32 %s227, %s228
      %s230 = smul.addr %s229, 8
      %s231 = scalar_lea.vmem %s1, %s230
      %p232 = pneg %p79
      %p233 = pneg %p76
      %p234 = pneg %p100
      %p235 = pneg %p97
      %p236 = pneg %p128
      %p237 = pneg %p125
      %s238 = smul.u32 8, %s21
      %p239 = scmp.lt.s32.totalorder %s20, 1
      %s240 = scalar_select %p239, %s20, 1
      %p241 = scmp.lt.s32.totalorder %s238, 7
      %s242 = scalar_select %p241, %s238, 7
      %s243 = smul.addr %s240, 8
      %s244 = sadd.s32 %s242, %s243
      %s245 = smul.addr %s244, 8
      %s246 = scalar_lea.vmem %s3, %s245
      %p247 = pneg %p156
      %p248 = pneg %p153
      %p249 = scmp.lt.s32.totalorder %s20, 1
      %s250 = scalar_select %p249, %s20, 1
      %p251 = scmp.lt.s32.totalorder %s21, 0
      %s252 = scalar_select %p251, %s21, 0
      %s253 = sadd.s32 %s252, %s250
      %s254 = smul.addr %s253, 2
      %s255 = scalar_lea.vmem %s4, %s254
      %s256 = smul.u32 8, %s21
      %p257 = scmp.lt.s32.totalorder %s20, 1
      %s258 = scalar_select %p257, %s20, 1
      %p259 = scmp.lt.s32.totalorder %s256, 7
      %s260 = scalar_select %p259, %s256, 7
      %s261 = smul.addr %s260, 2
      %s262 = smul.addr %s258, 16
      %s263 = sadd.s32 %s261, %s262
      %s264 = smul.addr %s263, 8
      %s265 = scalar_lea.vmem %s0, %s264
      %s266 = smul.u32 8, %s21
      %p267 = scmp.lt.s32.totalorder %s20, 1
      %s268 = scalar_select %p267, %s20, 1
      %p269 = scmp.lt.s32.totalorder %s21, 0
      %s270 = scalar_select %p269, %s21, 0
      %s271 = smul.addr %s270, 2
      %s272 = smul.addr %s268, 2
      %s273 = sadd.s32 %s271, %s272
      %s274 = smul.addr %s273, 8
      %s275 = scalar_lea.vmem %s1, %s274
      %s276 = smul.u32 8, %s21
      %p277 = scmp.lt.s32.totalorder %s20, 1
      %s278 = scalar_select %p277, %s20, 1
      %p279 = scmp.lt.s32.totalorder %s276, 7
      %s280 = scalar_select %p279, %s276, 7
      %s281 = smul.addr %s278, 8
      %s282 = sadd.s32 %s280, %s281
      %s283 = smul.addr %s282, 8
      %s284 = scalar_lea.vmem %s3, %s283
      %s285 = smul.u32 8, %s21
      %p286 = scmp.lt.s32.totalorder %s20, 1
      %s287 = scalar_select %p286, %s20, 1
      %p288 = scmp.lt.s32.totalorder %s21, 0
      %s289 = scalar_select %p288, %s21, 0
      %s290 = sadd.s32 %s289, %s287
      %s291 = smul.addr %s290, 2
      %s292 = scalar_lea.vmem %s4, %s291
      %v293 = vld [vmem:[%s265] sm:$0xff]
      %v294 = vld [vmem:[%s265 + $0x8] sm:$0xff]
      %v295 = vld [vmem:[%s265 + $0x10] sm:$0xff]
      %v296 = vld [vmem:[%s265 + $0x18] sm:$0xff]
      %v297 = vld [vmem:[%s265 + $0x20] sm:$0xff]
      %v298 = vld [vmem:[%s265 + $0x28] sm:$0xff]
      %v299 = vld [vmem:[%s265 + $0x30] sm:$0xff]
      %v300 = vld [vmem:[%s265 + $0x38] sm:$0xff]
      %v301 = vld [vmem:[%s265 + $0x40] sm:$0xff]
      %v302 = vld [vmem:[%s265 + $0x48] sm:$0xff]
      %v303 = vld [vmem:[%s265 + $0x50] sm:$0xff]
      %v304 = vld [vmem:[%s265 + $0x58] sm:$0xff]
      %v305 = vld [vmem:[%s265 + $0x60] sm:$0xff]
      %v306 = vld [vmem:[%s265 + $0x68] sm:$0xff]
      %v307 = vld [vmem:[%s265 + $0x70] sm:$0xff]
      %v308 = vld [vmem:[%s265 + $0x78] sm:$0xff]
      %v309 = vmax.f32 %v293, %v294
      %v310 = vmax.f32 %v295, %v296
      %v311 = vmax.f32 %v297, %v298
      %v312 = vmax.f32 %v299, %v300
      %v313 = vmax.f32 %v301, %v302
      %v314 = vmax.f32 %v303, %v304
      %v315 = vmax.f32 %v305, %v306
      %v316 = vmax.f32 %v307, %v308
      %325 = vrot.lane.b32.xlu0 %v309, 124
      %v326 = vpop.permute.xlu0 %325
      %327 = vrot.lane.b32.xlu0 %v310, 124
      %v328 = vpop.permute.xlu0 %327
      %329 = vrot.lane.b32.xlu0 %v311, 124
      %v330 = vpop.permute.xlu0 %329
      %331 = vrot.lane.b32.xlu0 %v312, 124
      %v332 = vpop.permute.xlu0 %331
      %333 = vrot.lane.b32.xlu0 %v313, 124
      %v334 = vpop.permute.xlu0 %333
      %335 = vrot.lane.b32.xlu0 %v314, 124
      %v336 = vpop.permute.xlu0 %335
      %337 = vrot.lane.b32.xlu0 %v315, 124
      %v338 = vpop.permute.xlu0 %337
      %339 = vrot.lane.b32.xlu0 %v316, 124
      %v340 = vpop.permute.xlu0 %339
      %v349 = vmax.f32 %v309, %v326
      %v350 = vmax.f32 %v310, %v328
      %v351 = vmax.f32 %v311, %v330
      %v352 = vmax.f32 %v312, %v332
      %v353 = vmax.f32 %v313, %v334
      %v354 = vmax.f32 %v314, %v336
      %v355 = vmax.f32 %v315, %v338
      %v356 = vmax.f32 %v316, %v340
      %v357 = vld [vmem:[%s275] sm:$0xff]
      %v358 = vld [vmem:[%s275 + $0x8] sm:$0xff]
      %v369 = vrot.slane %v357, 7
      %v370 = vrot.slane %v349, 7
      %v371 = vrot.slane %v350, 7
      %v372 = vrot.slane %v351, 7
      %v373 = vrot.slane %v352, 7
      %v374 = vrot.slane %v353, 7
      %v375 = vrot.slane %v354, 7
      %v376 = vrot.slane %v355, 7
      %v377 = vrot.slane %v356, 7
      %v378 = vrot.slane %v358, 7
      %vm389 = vcmask 1040384
      %v390 = vsel %vm389, 0.0, %v369
      %v391 = vsel %vm389, 0.0, %v370
      %v392 = vsel %vm389, 0.0, %v371
      %v393 = vsel %vm389, 0.0, %v372
      %v394 = vsel %vm389, 0.0, %v373
      %v395 = vsel %vm389, 0.0, %v374
      %v396 = vsel %vm389, 0.0, %v375
      %v397 = vsel %vm389, 0.0, %v376
      %v398 = vsel %vm389, 0.0, %v377
      %v399 = vsel %vm389, 0.0, %v378
      %v400 = vrot.slane %v357, 1
      %v401 = vrot.slane %v349, 1
      %v402 = vrot.slane %v350, 1
      %v403 = vrot.slane %v351, 1
      %v404 = vrot.slane %v352, 1
      %v405 = vrot.slane %v353, 1
      %v406 = vrot.slane %v354, 1
      %v407 = vrot.slane %v355, 1
      %v408 = vrot.slane %v356, 1
      %v409 = vrot.slane %v358, 1
      %vm420 = vcmask 1046528
      %v421 = vsel %vm420, %v400, 0.0
      %v422 = vsel %vm420, %v401, 0.0
      %v423 = vsel %vm420, %v402, 0.0
      %v424 = vsel %vm420, %v403, 0.0
      %v425 = vsel %vm420, %v404, 0.0
      %v426 = vsel %vm420, %v405, 0.0
      %v427 = vsel %vm420, %v406, 0.0
      %v428 = vsel %vm420, %v407, 0.0
      %v429 = vsel %vm420, %v408, 0.0
      %v430 = vsel %vm420, %v409, 0.0
      %431 = vrot.lane.b32.xlu0 %v357, 4
      %v432 = vpop.permute.xlu0 %431
      %433 = vrot.lane.b32.xlu0 %v349, 4
      %v434 = vpop.permute.xlu0 %433
      %435 = vrot.lane.b32.xlu0 %v350, 4
      %v436 = vpop.permute.xlu0 %435
      %437 = vrot.lane.b32.xlu0 %v351, 4
      %v438 = vpop.permute.xlu0 %437
      %439 = vrot.lane.b32.xlu0 %v352, 4
      %v440 = vpop.permute.xlu0 %439
      %441 = vrot.lane.b32.xlu0 %v353, 4
      %v442 = vpop.permute.xlu0 %441
      %443 = vrot.lane.b32.xlu0 %v354, 4
      %v444 = vpop.permute.xlu0 %443
      %445 = vrot.lane.b32.xlu0 %v355, 4
      %v446 = vpop.permute.xlu0 %445
      %463 = vrot.lane.b32.xlu0 %v421, 8
      %v464 = vpop.permute.xlu0 %463
      %465 = vrot.lane.b32.xlu0 %v422, 8
      %v466 = vpop.permute.xlu0 %465
      %467 = vrot.lane.b32.xlu0 %v423, 8
      %v468 = vpop.permute.xlu0 %467
      %469 = vrot.lane.b32.xlu0 %v424, 8
      %v470 = vpop.permute.xlu0 %469
      %471 = vrot.lane.b32.xlu0 %v425, 8
      %v472 = vpop.permute.xlu0 %471
      %473 = vrot.lane.b32.xlu0 %v426, 8
      %v474 = vpop.permute.xlu0 %473
      %475 = vrot.lane.b32.xlu0 %v427, 8
      %v476 = vpop.permute.xlu0 %475
      %477 = vrot.lane.b32.xlu0 %v428, 8
      %v478 = vpop.permute.xlu0 %477
      %495 = vrot.lane.b32.xlu0 %v391, 12
      %v496 = vpop.permute.xlu0 %495
      %497 = vrot.lane.b32.xlu0 %v392, 12
      %v498 = vpop.permute.xlu0 %497
      %499 = vrot.lane.b32.xlu0 %v393, 12
      %v500 = vpop.permute.xlu0 %499
      %501 = vrot.lane.b32.xlu0 %v394, 12
      %v502 = vpop.permute.xlu0 %501
      %503 = vrot.lane.b32.xlu0 %v395, 12
      %v504 = vpop.permute.xlu0 %503
      %505 = vrot.lane.b32.xlu0 %v396, 12
      %v506 = vpop.permute.xlu0 %505
      %507 = vrot.lane.b32.xlu0 %v397, 12
      %v508 = vpop.permute.xlu0 %507
      %509 = vrot.lane.b32.xlu0 %v398, 12
      %v510 = vpop.permute.xlu0 %509
      %519 = vrot.lane.b32.xlu0 %v349, 16
      %v520 = vpop.permute.xlu0 %519
      %521 = vrot.lane.b32.xlu0 %v350, 16
      %v522 = vpop.permute.xlu0 %521
      %523 = vrot.lane.b32.xlu0 %v351, 16
      %v524 = vpop.permute.xlu0 %523
      %525 = vrot.lane.b32.xlu0 %v352, 16
      %v526 = vpop.permute.xlu0 %525
      %527 = vrot.lane.b32.xlu0 %v353, 16
      %v528 = vpop.permute.xlu0 %527
      %529 = vrot.lane.b32.xlu0 %v354, 16
      %v530 = vpop.permute.xlu0 %529
      %531 = vrot.lane.b32.xlu0 %v355, 16
      %v532 = vpop.permute.xlu0 %531
      %533 = vrot.lane.b32.xlu0 %v356, 16
      %v534 = vpop.permute.xlu0 %533
      %544 = vrot.lane.b32.xlu0 %v422, 20
      %v545 = vpop.permute.xlu0 %544
      %546 = vrot.lane.b32.xlu0 %v423, 20
      %v547 = vpop.permute.xlu0 %546
      %548 = vrot.lane.b32.xlu0 %v424, 20
      %v549 = vpop.permute.xlu0 %548
      %550 = vrot.lane.b32.xlu0 %v425, 20
      %v551 = vpop.permute.xlu0 %550
      %552 = vrot.lane.b32.xlu0 %v426, 20
      %v553 = vpop.permute.xlu0 %552
      %554 = vrot.lane.b32.xlu0 %v427, 20
      %v555 = vpop.permute.xlu0 %554
      %556 = vrot.lane.b32.xlu0 %v428, 20
      %v557 = vpop.permute.xlu0 %556
      %558 = vrot.lane.b32.xlu0 %v429, 20
      %v559 = vpop.permute.xlu0 %558
      %569 = vrot.lane.b32.xlu0 %v392, 24
      %v570 = vpop.permute.xlu0 %569
      %571 = vrot.lane.b32.xlu0 %v393, 24
      %v572 = vpop.permute.xlu0 %571
      %573 = vrot.lane.b32.xlu0 %v394, 24
      %v574 = vpop.permute.xlu0 %573
      %575 = vrot.lane.b32.xlu0 %v395, 24
      %v576 = vpop.permute.xlu0 %575
      %577 = vrot.lane.b32.xlu0 %v396, 24
      %v578 = vpop.permute.xlu0 %577
      %579 = vrot.lane.b32.xlu0 %v397, 24
      %v580 = vpop.permute.xlu0 %579
      %581 = vrot.lane.b32.xlu0 %v398, 24
      %v582 = vpop.permute.xlu0 %581
      %583 = vrot.lane.b32.xlu0 %v399, 24
      %v584 = vpop.permute.xlu0 %583
      %593 = vrot.lane.b32.xlu0 %v350, 28
      %v594 = vpop.permute.xlu0 %593
      %595 = vrot.lane.b32.xlu0 %v351, 28
      %v596 = vpop.permute.xlu0 %595
      %597 = vrot.lane.b32.xlu0 %v352, 28
      %v598 = vpop.permute.xlu0 %597
      %599 = vrot.lane.b32.xlu0 %v353, 28
      %v600 = vpop.permute.xlu0 %599
      %601 = vrot.lane.b32.xlu0 %v354, 28
      %v602 = vpop.permute.xlu0 %601
      %603 = vrot.lane.b32.xlu0 %v355, 28
      %v604 = vpop.permute.xlu0 %603
      %605 = vrot.lane.b32.xlu0 %v356, 28
      %v606 = vpop.permute.xlu0 %605
      %607 = vrot.lane.b32.xlu0 %v358, 28
      %v608 = vpop.permute.xlu0 %607
      %618 = vrot.lane.b32.xlu0 %v423, 32
      %v619 = vpop.permute.xlu0 %618
      %620 = vrot.lane.b32.xlu0 %v424, 32
      %v621 = vpop.permute.xlu0 %620
      %622 = vrot.lane.b32.xlu0 %v425, 32
      %v623 = vpop.permute.xlu0 %622
      %624 = vrot.lane.b32.xlu0 %v426, 32
      %v625 = vpop.permute.xlu0 %624
      %626 = vrot.lane.b32.xlu0 %v427, 32
      %v627 = vpop.permute.xlu0 %626
      %628 = vrot.lane.b32.xlu0 %v428, 32
      %v629 = vpop.permute.xlu0 %628
      %630 = vrot.lane.b32.xlu0 %v429, 32
      %v631 = vpop.permute.xlu0 %630
      %632 = vrot.lane.b32.xlu0 %v430, 32
      %v633 = vpop.permute.xlu0 %632
      %vm642 = vcmask 31744
      %v643 = vsel %vm642, %v390, %v432
      %v644 = vsel %vm642, %v391, %v434
      %v645 = vsel %vm642, %v392, %v436
      %v646 = vsel %vm642, %v393, %v438
      %v647 = vsel %vm642, %v394, %v440
      %v648 = vsel %vm642, %v395, %v442
      %v649 = vsel %vm642, %v396, %v444
      %v650 = vsel %vm642, %v397, %v446
      %vm651 = vcmask 64512
      %v652 = vsel %vm651, %v643, %v464
      %v653 = vsel %vm651, %v644, %v466
      %v654 = vsel %vm651, %v645, %v468
      %v655 = vsel %vm651, %v646, %v470
      %v656 = vsel %vm651, %v647, %v472
      %v657 = vsel %vm651, %v648, %v474
      %v658 = vsel %vm651, %v649, %v476
      %v659 = vsel %vm651, %v650, %v478
      %vm660 = vcmask 97280
      %v661 = vsel %vm660, %v652, %v496
      %v662 = vsel %vm660, %v653, %v498
      %v663 = vsel %vm660, %v654, %v500
      %v664 = vsel %vm660, %v655, %v502
      %v665 = vsel %vm660, %v656, %v504
      %v666 = vsel %vm660, %v657, %v506
      %v667 = vsel %vm660, %v658, %v508
      %v668 = vsel %vm660, %v659, %v510
      %vm669 = vcmask 130048
      %v670 = vsel %vm669, %v661, %v520
      %v671 = vsel %vm669, %v662, %v522
      %v672 = vsel %vm669, %v663, %v524
      %v673 = vsel %vm669, %v664, %v526
      %v674 = vsel %vm669, %v665, %v528
      %v675 = vsel %vm669, %v666, %v530
      %v676 = vsel %vm669, %v667, %v532
      %v677 = vsel %vm669, %v668, %v534
      %vm678 = vcmask 162816
      %v679 = vsel %vm678, %v670, %v545
      %v680 = vsel %vm678, %v671, %v547
      %v681 = vsel %vm678, %v672, %v549
      %v682 = vsel %vm678, %v673, %v551
      %v683 = vsel %vm678, %v674, %v553
      %v684 = vsel %vm678, %v675, %v555
      %v685 = vsel %vm678, %v676, %v557
      %v686 = vsel %vm678, %v677, %v559
      %vm687 = vcmask 195584
      %v688 = vsel %vm687, %v679, %v570
      %v689 = vsel %vm687, %v680, %v572
      %v690 = vsel %vm687, %v681, %v574
      %v691 = vsel %vm687, %v682, %v576
      %v692 = vsel %vm687, %v683, %v578
      %v693 = vsel %vm687, %v684, %v580
      %v694 = vsel %vm687, %v685, %v582
      %v695 = vsel %vm687, %v686, %v584
      %vm696 = vcmask 228352
      %v697 = vsel %vm696, %v688, %v594
      %v698 = vsel %vm696, %v689, %v596
      %v699 = vsel %vm696, %v690, %v598
      %v700 = vsel %vm696, %v691, %v600
      %v701 = vsel %vm696, %v692, %v602
      %v702 = vsel %vm696, %v693, %v604
      %v703 = vsel %vm696, %v694, %v606
      %v704 = vsel %vm696, %v695, %v608
      %vm705 = vcmask 261120
      %v706 = vsel %vm705, %v697, %v619
      %v707 = vsel %vm705, %v698, %v621
      %v708 = vsel %vm705, %v699, %v623
      %v709 = vsel %vm705, %v700, %v625
      %v710 = vsel %vm705, %v701, %v627
      %v711 = vsel %vm705, %v702, %v629
      %v712 = vsel %vm705, %v703, %v631
      %v713 = vsel %vm705, %v704, %v633
      %v714 = vld [vmem:[%s2] sm:$0xff]
      %v715 = vld [vmem:[%s2 + $0x8] sm:$0xff]
      %v716 = vld [vmem:[%s2 + $0x10] sm:$0xff]
      %v717 = vld [vmem:[%s2 + $0x18] sm:$0xff]
      %v718 = vld [vmem:[%s2 + $0x20] sm:$0xf]
      %vm719 = vcmask 293888
      %v721 = vsel %vm719, %v706, 0
      %v724 = vsel %vm719, %v707, 0
      %v727 = vsel %vm719, %v708, 0
      %v730 = vsel %vm719, %v709, 0
      %v733 = vsel %vm719, %v710, 0
      %v736 = vsel %vm719, %v711, 0
      %v739 = vsel %vm719, %v712, 0
      %v742 = vsel %vm719, %v713, 0
      %vm744 = vcmask 1043456
      %v746 = vsel %vm744, %v718, 0
      %748 = vmatpush.msra.mxu0 0.0
      %749 = vmatpush.msra.mxu0 0.0
      %750 = vmatpush.msra.mxu0 0.0
      %751 = vmatpush.msra.mxu0 0.0
      %752 = vmatpush.msra.mxu0 0.0
      %753 = vmatpush.msra.mxu0 0.0
      %754 = vmatpush.msra.mxu0 0.0
      %755 = vmatpush.msra.mxu0 0.0
      %756 = vmatpush.msra.mxu0 0.0
      %757 = vmatpush.msra.mxu0 0.0
      %758 = vmatpush.msra.mxu0 0.0
      %759 = vmatpush.msra.mxu0 %v746
      %760 = vmatpush.msra.mxu0 %v717
      %761 = vmatpush.msra.mxu0 %v716
      %762 = vmatpush.msra.mxu0 %v715
      %763 = vmatpush.msra.mxu0 %v714
      %764 = vmatmul.f32.gmra.mxu0 %v721
      %v765 = vpop.f32.mrf.mxu0
      %v766 = vadd.f32 0.0, %v765
      %767 = vmatmul.f32.gmra.mxu0 %v724
      %v768 = vpop.f32.mrf.mxu0
      %v769 = vadd.f32 0.0, %v768
      %770 = vmatmul.f32.gmra.mxu0 %v727
      %v771 = vpop.f32.mrf.mxu0
      %v772 = vadd.f32 0.0, %v771
      %773 = vmatmul.f32.gmra.mxu0 %v730
      %v774 = vpop.f32.mrf.mxu0
      %v775 = vadd.f32 0.0, %v774
      %776 = vmatmul.f32.gmra.mxu0 %v733
      %v777 = vpop.f32.mrf.mxu0
      %v778 = vadd.f32 0.0, %v777
      %779 = vmatmul.f32.gmra.mxu0 %v736
      %v780 = vpop.f32.mrf.mxu0
      %v781 = vadd.f32 0.0, %v780
      %782 = vmatmul.f32.gmra.mxu0 %v739
      %v783 = vpop.f32.mrf.mxu0
      %v784 = vadd.f32 0.0, %v783
      %785 = vmatmul.f32.gmra.mxu0 %v742
      %v786 = vpop.f32.mrf.mxu0
      %v787 = vadd.f32 0.0, %v786
      %788 = vdwg.mxu0
      %789 = vst.msk [vmem:[%s284] sm:$0xff] %vm651, %v766
      %790 = vst.msk [vmem:[%s284 + $0x8] sm:$0xff] %vm651, %v769
      %791 = vst.msk [vmem:[%s284 + $0x10] sm:$0xff] %vm651, %v772
      %792 = vst.msk [vmem:[%s284 + $0x18] sm:$0xff] %vm651, %v775
      %793 = vst.msk [vmem:[%s284 + $0x20] sm:$0xff] %vm651, %v778
      %794 = vst.msk [vmem:[%s284 + $0x28] sm:$0xff] %vm651, %v781
      %795 = vst.msk [vmem:[%s284 + $0x30] sm:$0xff] %vm651, %v784
      %796 = vst.msk [vmem:[%s284 + $0x38] sm:$0xff] %vm651, %v787
      %v797 = vsel %vm651, %v766, 0.0
      %v798 = vsel %vm651, %v769, 0.0
      %v799 = vadd.f32 %v797, %v798
      %v800 = vsel %vm651, %v772, 0.0
      %v801 = vadd.f32 %v799, %v800
      %v802 = vsel %vm651, %v775, 0.0
      %v803 = vadd.f32 %v801, %v802
      %v804 = vsel %vm651, %v778, 0.0
      %v805 = vadd.f32 %v803, %v804
      %v806 = vsel %vm651, %v781, 0.0
      %v807 = vadd.f32 %v805, %v806
      %v808 = vsel %vm651, %v784, 0.0
      %v809 = vadd.f32 %v807, %v808
      %v810 = vsel %vm651, %v787, 0.0
      %v811 = vadd.f32 %v809, %v810
      %v812 = vrot.slane %v811, 4
      %v813 = vadd.f32 %v811, %v812
      %v814 = vrot.slane %v813, 2
      %v815 = vadd.f32 %v813, %v814
      %v816 = vrot.slane %v815, 1
      %v817 = vadd.f32 %v815, %v816
      %v818 = vmul.f32 %v766, %v766
      %v819 = vmul.f32 %v769, %v769
      %v820 = vmul.f32 %v772, %v772
      %v821 = vmul.f32 %v775, %v775
      %v822 = vmul.f32 %v778, %v778
      %v823 = vmul.f32 %v781, %v781
      %v824 = vmul.f32 %v784, %v784
      %v825 = vmul.f32 %v787, %v787
      %v826 = vsel %vm651, %v818, 0.0
      %v827 = vsel %vm651, %v819, 0.0
      %v828 = vadd.f32 %v826, %v827
      %v829 = vsel %vm651, %v820, 0.0
      %v830 = vadd.f32 %v828, %v829
      %v831 = vsel %vm651, %v821, 0.0
      %v832 = vadd.f32 %v830, %v831
      %v833 = vsel %vm651, %v822, 0.0
      %v834 = vadd.f32 %v832, %v833
      %v835 = vsel %vm651, %v823, 0.0
      %v836 = vadd.f32 %v834, %v835
      %v837 = vsel %vm651, %v824, 0.0
      %v838 = vadd.f32 %v836, %v837
      %v839 = vsel %vm651, %v825, 0.0
      %v840 = vadd.f32 %v838, %v839
      %v841 = vrot.slane %v840, 4
      %v842 = vadd.f32 %v840, %v841
      %v843 = vrot.slane %v842, 2
      %v844 = vadd.f32 %v842, %v843
      %v845 = vrot.slane %v844, 1
      %v846 = vadd.f32 %v844, %v845
      %v847 = vsel %vm389, %v817, %v846
      %vm848 = vcmask 58368
      %849 = vst.msk [vmem:[%s292] sm:$0x3] %vm848, %v847
      %s850 = smul.u32 8, %s21
      %p851 = scmp.lt.s32.totalorder %s20, 1
      %s852 = scalar_select %p851, %s20, 1
      %p853 = scmp.lt.s32.totalorder %s850, 7
      %s854 = scalar_select %p853, %s850, 7
      %s855 = smul.addr %s852, 8
      %s856 = sadd.s32 %s854, %s855
      %s857 = smul.addr %s856, 8
      %s858 = scalar_lea.vmem %s3, %s857
      %p859 = scmp.lt.s32.totalorder %s20, 1
      %s860 = scalar_select %p859, %s20, 1
      %p861 = scmp.lt.s32.totalorder %s21, 0
      %s862 = scalar_select %p861, %s21, 0
      %s863 = sadd.s32 %s862, %s860
      %s864 = smul.addr %s863, 2
      %s865 = scalar_lea.vmem %s4, %s864
      // Predicated region
      $region33: #{down_forward.2} parent=31 // pred_check
        %p866 = pneg %p125
      $region34: #{down_forward.2} parent=31 // pred_check_branch
        %868 = sbr.rel (%p866) target = $region36
      $region35: #{down_forward.2} parent=31 // pred_region
        %s869 = smul.u32 8, %s21
      $region36: #{down_forward.2} parent=31 // pred_fallthru
        _
      // Predicated region
      $region37: #{down_forward.2} parent=31 // pred_check
        %p870 = pneg %p153
      $region38: #{down_forward.2} parent=31 // pred_check_branch
        %872 = sbr.rel (%p870) target = $region40
      $region39: #{down_forward.2} parent=31 // pred_region
        _
      $region40: #{down_forward.2} parent=31 // pred_fallthru
        _
    $region32: #{down_forward.2} parent=5 // pred_fallthru
      _
    %p873 = scmp.le.s32.totalorder 2, %s11
    // Predicated region
    $region41: #{down_forward.2} parent=5 // pred_check
      %p874 = pneg %p873
    $region42: #{down_forward.2} parent=5 // pred_check_branch
      %876 = sbr.rel (%p874) target = $region44
    $region43: #{down_forward.2} parent=5 // pred_region
      %s877 = ssub.s32 %s11, 2
      // Predicated region
      $region45: #{down_forward.2} parent=43 // pred_check
        %p878 = pneg %p131
      $region46: #{down_forward.2} parent=43 // pred_check_branch
        %880 = sbr.rel (%p878) target = $region48
      $region47: #{down_forward.2} parent=43 // pred_region
        %s881 = smul.u32 8, %s23
        %p882 = scmp.lt.s32.totalorder %s22, 1
        %s883 = scalar_select %p882, %s22, 1
        %p884 = scmp.lt.s32.totalorder %s881, 7
        %s885 = scalar_select %p884, %s881, 7
        %s886 = smul.addr %s883, 8
        %s887 = sadd.s32 %s885, %s886
        %s888 = smul.addr %s887, 8
        %s889 = scalar_lea.vmem %s3, %s888
      $region48: #{down_forward.2} parent=43 // pred_fallthru
        _
      // Predicated region
      $region49: #{down_forward.2} parent=43 // pred_check
        %p890 = pneg %p159
      $region50: #{down_forward.2} parent=43 // pred_check_branch
        %892 = sbr.rel (%p890) target = $region52
      $region51: #{down_forward.2} parent=43 // pred_region
        %p893 = scmp.lt.s32.totalorder %s22, 1
        %s894 = scalar_select %p893, %s22, 1
        %p895 = scmp.lt.s32.totalorder %s23, 0
        %s896 = scalar_select %p895, %s23, 0
        %s897 = sadd.s32 %s896, %s894
        %s898 = smul.addr %s897, 2
        %s899 = scalar_lea.vmem %s4, %s898
      $region52: #{down_forward.2} parent=43 // pred_fallthru
        _
    $region44: #{down_forward.2} parent=5 // pred_fallthru
      _
  $region6: #{down_forward.2} parent=0 // loop_footer
    %s15 = sadd.s32 1, %s11
  $region7: #{down_forward.2} parent=0 // loop_footer_branch
    %10 = sbr.rel target = $region3
  $region8: #{down_forward.2} parent=0 // loop_exit
    _

</llo_original>
